<compile_context>
chip_gen: v7x
topology: tpu7x:2x2x1
jax: 0.10.0
libtpu: 0.0.40
codegen_flags: <defaults>
</compile_context>

<pallas_src>
import math

import jax
import jax.numpy as jnp
from jax.experimental import pallas as pl
from jax.experimental.pallas import tpu as pltpu

D_MODEL = 32
NUM_HEADS = 8
D_K = D_MODEL // NUM_HEADS


def _round_up(x, m):
    return ((x + m - 1) // m) * m


def _choose_batch_tile(batch, cap=256):
    """Batch tile: multiple of 8, <= cap, grid >= 2 when there is enough work."""
    b8 = _round_up(max(batch, 1), 8)
    g = pl.cdiv(b8, min(cap, b8))
    if g < 2 and b8 >= 16:
        g = 2                      # let the 'parallel' axis use both v7x TCs
    return _round_up(pl.cdiv(b8, g), 8)


def _build_kernel(seq_len, num_heads, return_attn, mxu_dtype):
    hs = num_heads * seq_len

    def kernel(t_ref, x_ref, dl_ref, te_ref, wqkv_ref, bqkv_ref,
               wout_ref, bout_ref, hmask_ref, segsum_ref, *rest):
        if return_attn:
            avg_ref, out_ref, attn_ref = rest
        else:
            (out_ref,) = rest

        tb, s, d = x_ref.shape
        t = t_ref[0]

        # urgency from time-to-deadline; (TB,S,1) broadcasts over the lane axis
        urgency = jnp.exp((t - dl_ref[...]) * (1.0 / 3600.0))          # (TB,S,1)
        xe = (x_ref[...] + te_ref[...][None]) * urgency                # (TB,S,D)

        # fused, lane-padded Q|K|V projection on the flattened (TB*S, D) slab
        xe2d = xe.reshape(tb * s, d).astype(mxu_dtype)
        qkv = jnp.dot(xe2d, wqkv_ref[...].astype(mxu_dtype),
                      preferred_element_type=jnp.float32) + bqkv_ref[...]

        q = qkv[:, 0 * d:1 * d].reshape(tb, s, d)   # 1/sqrt(d_k) folded into wq
        k = qkv[:, 1 * d:2 * d].reshape(tb, s, d)
        v = qkv[:, 2 * d:3 * d].reshape(tb, s, d)

        # head expansion: sublane block h of K_exp/V_exp is K/V masked to the
        # lanes of head h  ->  one matmul covers all 8 heads.
        hmask = hmask_ref[...][None]                                   # (1,HS,D)
        k_exp = (jnp.concatenate([k] * num_heads, axis=1) * hmask).astype(mxu_dtype)
        v_exp = (jnp.concatenate([v] * num_heads, axis=1) * hmask).astype(mxu_dtype)

        # all-head scores in one matmul: (TB, S, H*S)
        scores = jnp.einsum('bqd,bnd->bqn', q.astype(mxu_dtype), k_exp,
                            preferred_element_type=jnp.float32)

        # segmented (per-head) softmax over the 64-wide lane axis.  Subtracting
        # the global row max is a constant shift inside every segment -> exact.
        m = jnp.max(scores, axis=-1, keepdims=True)
        p = jnp.exp(scores - m)
        denom = jnp.dot(p.reshape(tb * s, hs), segsum_ref[...],
                        preferred_element_type=jnp.float32).reshape(tb, s, hs)
        p = p * pl.reciprocal(denom, approx=False)

        # full context in one matmul (contraction K = H*S = 64)
        ctx = jnp.einsum('bqn,bnd->bqd', p.astype(mxu_dtype), v_exp,
                         preferred_element_type=jnp.float32)           # (TB,S,D)

        # folded MHA-output + urgency projection
        y = jnp.dot(ctx.reshape(tb * s, d).astype(mxu_dtype),
                    wout_ref[...].astype(mxu_dtype),
                    preferred_element_type=jnp.float32) + bout_ref[...]
        y3 = y.reshape(tb, s, d)

        # lane-dense output slab (TB, S*D) = (TB, 256): static lane-slice stores
        for si in range(seq_len):
            out_ref[:, si * d:(si + 1) * d] = y3[:, si, :]

        if return_attn:
            # head-averaged attention weights via a tiny (HS, S) matmul
            attn = jnp.dot(p.reshape(tb * s, hs), avg_ref[...],
                           preferred_element_type=jnp.float32)
            attn_ref[...] = attn.reshape(tb, s, s)

        # NOTE: nn.Dropout on attention weights -> identity (eval semantics)

    return kernel


def temporal_attention(task_embeddings, deadlines, current_time, params,
                       *, batch_tile=None, return_attn=True,
                       mxu_dtype=jnp.float32):
    B, S, D = task_embeddings.shape
    assert D == D_MODEL and D % NUM_HEADS == 0

    TB = _choose_batch_tile(B) if batch_tile is None else batch_tile
    assert TB % 8 == 0
    grid_b = pl.cdiv(B, TB)
    Bp = grid_b * TB

    x = task_embeddings.astype(jnp.float32)
    dl = deadlines.reshape(B, S, 1).astype(jnp.float32)
    if Bp != B:  # pad batch up to a multiple of TB (padded rows discarded later)
        x = jnp.pad(x, ((0, Bp - B), (0, 0), (0, 0)))
        dl = jnp.pad(dl, ((0, Bp - B), (0, 0), (0, 0)),
                     constant_values=float(current_time))
    t = jnp.asarray([current_time], jnp.float32)

    te_full = params["temporal_encoding"]
    if S <= te_full.shape[0]:
        te = te_full[:S].astype(jnp.float32)
    else:  # mirrors the PyTorch guard: no temporal encoding if seq too long
        te = jnp.zeros((S, D), jnp.float32)

    # fold softmax scale into Q; fuse Q|K|V; lane-pad 3D=96 -> 128 columns
    scale = 1.0 / math.sqrt(D // NUM_HEADS)
    pad_cols = _round_up(3 * D, 128) - 3 * D
    wqkv = jnp.concatenate(
        [params["wq"] * scale, params["wk"], params["wv"],
         jnp.zeros((D, pad_cols), jnp.float32)], axis=1)               # (D,128)
    bqkv = jnp.concatenate(
        [params["bq"] * scale, params["bk"], params["bv"],
         jnp.zeros((1, pad_cols), jnp.float32)], axis=1)               # (1,128)
    # fold w_o with the urgency projection (mathematically exact)
    wout = params["wo"] @ params["wu"]                                  # (D,D)
    bout = params["bo"] @ params["wu"] + params["bu"]                   # (1,D)

    HS = NUM_HEADS * S
    # per-head lane mask: row h*S+j keeps only head h's lanes
    hmask = ((jnp.arange(HS)[:, None] // S) ==
             (jnp.arange(D)[None, :] // (D // NUM_HEADS))).astype(jnp.float32)
    # block-diagonal ones: segmented softmax denominator via matmul
    segsum = jnp.kron(jnp.eye(NUM_HEADS, dtype=jnp.float32),
                      jnp.ones((S, S), jnp.float32))                   # (HS,HS)
    avg_mat = jnp.tile(jnp.eye(S, dtype=jnp.float32),
                       (NUM_HEADS, 1)) / NUM_HEADS                     # (HS,S)

    def _const(shape):
        nd = len(shape)
        return pl.BlockSpec(shape, lambda b, _nd=nd: (0,) * _nd)

    in_specs = [
        pl.BlockSpec(memory_space=pltpu.MemorySpace.SMEM),             # current_time
        pl.BlockSpec((TB, S, D), lambda b: (b, 0, 0)),                 # embeddings
        pl.BlockSpec((TB, S, 1), lambda b: (b, 0, 0)),                 # deadlines
        _const(te.shape), _const(wqkv.shape), _const(bqkv.shape),
        _const(wout.shape), _const(bout.shape),
        _const(hmask.shape), _const(segsum.shape),
    ]
    inputs = [t, x, dl, te, wqkv, bqkv, wout, bout, hmask, segsum]

    out_specs = [pl.BlockSpec((TB, S * D), lambda b: (b, 0))]          # lane-dense
    out_shape = [jax.ShapeDtypeStruct((Bp, S * D), jnp.float32)]
    if return_attn:
        in_specs.append(_const(avg_mat.shape))
        inputs.append(avg_mat)
        out_specs.append(pl.BlockSpec((TB, S, S), lambda b: (b, 0, 0)))
        out_shape.append(jax.ShapeDtypeStruct((Bp, S, S), jnp.float32))

    kernel = _build_kernel(S, NUM_HEADS, return_attn, mxu_dtype)
    fn = pl.pallas_call(
        kernel,
        grid=(grid_b,),
        in_specs=in_specs,
        out_specs=out_specs,
        out_shape=out_shape,
        compiler_params=pltpu.CompilerParams(
            dimension_semantics=("parallel",),
            vmem_limit_bytes=48 * 1024 * 1024,
        ),
    )
    outs = fn(*inputs)
    y = outs[0][:B].reshape(B, S, D)
    if return_attn:
        return y, outs[1][:B]
    return y


def reference(task_embeddings, deadlines, current_time, params):
    """Plain-JAX reference matching the PyTorch forward (eval mode)."""
    B, S, D = task_embeddings.shape
    urg = jnp.exp(-(deadlines - current_time) / 3600.0)          # (B, S)
    x = task_embeddings + params["temporal_encoding"][:S][None]
    xe = x * urg[..., None]
    q = xe @ params["wq"] + params["bq"]
    k = xe @ params["wk"] + params["bk"]
    v = xe @ params["wv"] + params["bv"]
    qh = q.reshape(B, S, NUM_HEADS, D_K).transpose(0, 2, 1, 3)
    kh = k.reshape(B, S, NUM_HEADS, D_K).transpose(0, 2, 1, 3)
    vh = v.reshape(B, S, NUM_HEADS, D_K).transpose(0, 2, 1, 3)
    scores = (qh @ kh.transpose(0, 1, 3, 2)) / math.sqrt(D_K)
    p = jax.nn.softmax(scores, axis=-1)
    ao = (p @ vh).transpose(0, 2, 1, 3).reshape(B, S, D)
    o = ao @ params["wo"] + params["bo"]
    y = o @ params["wu"] + params["bu"]
    return y, p.mean(axis=1)


if __name__ == "__main__":
    B, S, D = 2, 8, D_MODEL
    MAX_SEQ = 16  # max_sequence_length (kept small for the synthetic test)

    key = jax.random.PRNGKey(0)
    ks = jax.random.split(key, 16)

    def w(k):  # deterministic small weights; stored transposed (in, out)
        return jax.random.normal(k, (D, D), jnp.float32) * 0.05

    def bias(k):
        return jax.random.normal(k, (1, D), jnp.float32) * 0.01

    params = {
        # nn.Parameter(torch.zeros(max_seq, d_model)) -> synthetic nonzero init
        "temporal_encoding": jax.random.normal(ks[0], (MAX_SEQ, D), jnp.float32) * 0.02,
        "wq": w(ks[1]), "bq": bias(ks[2]),
        "wk": w(ks[3]), "bk": bias(ks[4]),
        "wv": w(ks[5]), "bv": bias(ks[6]),
        "wo": w(ks[7]), "bo": bias(ks[8]),
        "wu": w(ks[9]), "bu": bias(ks[10]),
        # TODO(synk): time_decay_factor parameter exists in __init__ but is unused
        # in forward(), so it is omitted here.
    }

    task_embeddings = jax.random.normal(ks[11], (B, S, D), jnp.float32)
    current_time = 1000.0
    deadlines = current_time + jax.random.uniform(
        ks[12], (B, S), jnp.float32, minval=60.0, maxval=7200.0
    )

    out, attn = temporal_attention(task_embeddings, deadlines, current_time, params)
    out = jax.block_until_ready(out)
    attn = jax.block_until_ready(attn)

    ref_out, ref_attn = reference(task_embeddings, deadlines, current_time, params)
    assert out.shape == (B, S, D) and attn.shape == (B, S, S)
    assert jnp.allclose(out, ref_out, atol=1e-4, rtol=1e-4)
    assert jnp.allclose(attn, ref_attn, atol=1e-4, rtol=1e-4)

    # attn-free fast path (drops the attention-weights store stream entirely)
    out_fast = temporal_attention(task_embeddings, deadlines, current_time, params,
                                  return_attn=False)
    out_fast = jax.block_until_ready(out_fast)
    assert jnp.allclose(out_fast, ref_out, atol=1e-4, rtol=1e-4)

    # batch-padding + multi-step "parallel" grid path
    B2 = 20
    x2 = jax.random.normal(ks[13], (B2, S, D), jnp.float32)
    dl2 = current_time + jax.random.uniform(
        ks[14], (B2, S), jnp.float32, minval=60.0, maxval=7200.0)
    out2, attn2 = temporal_attention(x2, dl2, current_time, params)
    out2 = jax.block_until_ready(out2)
    ref_out2, ref_attn2 = reference(x2, dl2, current_time, params)
    assert jnp.allclose(out2, ref_out2, atol=1e-4, rtol=1e-4)
    assert jnp.allclose(attn2, ref_attn2, atol=1e-4, rtol=1e-4)

    print("KERNEL_OK")
</pallas_src>

<mosaic_0001>
module attributes {stable_mosaic.version = 11 : i64} {
  func.func @kernel(%arg0: i32, %arg1: memref<1xf32, #tpu.memory_space<smem>>, %arg2: memref<8x8x32xf32, #tpu.memory_space<vmem>>, %arg3: memref<8x8x1xf32, #tpu.memory_space<vmem>>, %arg4: memref<8x32xf32, #tpu.memory_space<vmem>>, %arg5: memref<32x128xf32, #tpu.memory_space<vmem>>, %arg6: memref<1x128xf32, #tpu.memory_space<vmem>>, %arg7: memref<32x32xf32, #tpu.memory_space<vmem>>, %arg8: memref<1x32xf32, #tpu.memory_space<vmem>>, %arg9: memref<64x32xf32, #tpu.memory_space<vmem>>, %arg10: memref<64x64xf32, #tpu.memory_space<vmem>>, %arg11: memref<64x8xf32, #tpu.memory_space<vmem>>, %arg12: memref<8x256xf32, #tpu.memory_space<vmem>>, %arg13: memref<8x8x8xf32, #tpu.memory_space<vmem>>) attributes {dimension_semantics = [#tpu.dimension_semantics<parallel>], iteration_bounds = array<i64: 1>, scalar_prefetch = 0 : i64, scratch_operands = 0 : i64, tpu.core_type = #tpu.core_type<tc>, window_params = [{transform_indices = @transform_0, window_bounds = array<i64: 1>}, {transform_indices = @transform_1, window_bounds = array<i64: 8, 8, 32>}, {transform_indices = @transform_2, window_bounds = array<i64: 8, 8, 1>}, {pipeline_mode = #tpu.pipeline_mode<synchronous>, transform_indices = @transform_3, window_bounds = array<i64: 8, 32>}, {pipeline_mode = #tpu.pipeline_mode<synchronous>, transform_indices = @transform_4, window_bounds = array<i64: 32, 128>}, {pipeline_mode = #tpu.pipeline_mode<synchronous>, transform_indices = @transform_5, window_bounds = array<i64: 1, 128>}, {pipeline_mode = #tpu.pipeline_mode<synchronous>, transform_indices = @transform_6, window_bounds = array<i64: 32, 32>}, {pipeline_mode = #tpu.pipeline_mode<synchronous>, transform_indices = @transform_7, window_bounds = array<i64: 1, 32>}, {pipeline_mode = #tpu.pipeline_mode<synchronous>, transform_indices = @transform_8, window_bounds = array<i64: 64, 32>}, {pipeline_mode = #tpu.pipeline_mode<synchronous>, transform_indices = @transform_9, window_bounds = array<i64: 64, 64>}, {pipeline_mode = #tpu.pipeline_mode<synchronous>, transform_indices = @transform_10, window_bounds = array<i64: 64, 8>}, {transform_indices = @transform_11, window_bounds = array<i64: 8, 256>}, {transform_indices = @transform_12, window_bounds = array<i64: 8, 8, 8>}]} {
    %c0 = arith.constant 0 : index
    %0 = memref.load %arg1[%c0] : memref<1xf32, #tpu.memory_space<smem>>
    %c0_0 = arith.constant 0 : index
    %c0_1 = arith.constant 0 : index
    %c0_2 = arith.constant 0 : index
    %1 = vector.load %arg3[%c0_0, %c0_1, %c0_2] : memref<8x8x1xf32, #tpu.memory_space<vmem>>, vector<8x8x1xf32>
    %2 = vector.broadcast %0 : f32 to vector<8x8x1xf32>
    %3 = arith.subf %2, %1 : vector<8x8x1xf32>
    %cst = arith.constant 2.77777785E-4 : f32
    %4 = vector.broadcast %cst : f32 to vector<8x8x1xf32>
    %5 = arith.mulf %3, %4 : vector<8x8x1xf32>
    %6 = math.exp %5 : vector<8x8x1xf32>
    %c0_3 = arith.constant 0 : index
    %c0_4 = arith.constant 0 : index
    %c0_5 = arith.constant 0 : index
    %7 = vector.load %arg2[%c0_3, %c0_4, %c0_5] : memref<8x8x32xf32, #tpu.memory_space<vmem>>, vector<8x8x32xf32>
    %c0_6 = arith.constant 0 : index
    %c0_7 = arith.constant 0 : index
    %8 = vector.load %arg4[%c0_6, %c0_7] : memref<8x32xf32, #tpu.memory_space<vmem>>, vector<8x32xf32>
    %9 = vector.shape_cast %8 : vector<8x32xf32> to vector<1x8x32xf32>
    %10 = vector.broadcast %9 : vector<1x8x32xf32> to vector<8x8x32xf32>
    %11 = arith.addf %7, %10 : vector<8x8x32xf32>
    %12 = vector.broadcast %6 : vector<8x8x1xf32> to vector<8x8x32xf32>
    %13 = arith.mulf %11, %12 : vector<8x8x32xf32>
    %14 = vector.shape_cast %13 : vector<8x8x32xf32> to vector<64x32xf32>
    %c0_8 = arith.constant 0 : index
    %c0_9 = arith.constant 0 : index
    %15 = vector.load %arg5[%c0_8, %c0_9] : memref<32x128xf32, #tpu.memory_space<vmem>>, vector<32x128xf32>
    %cst_10 = arith.constant dense<0.000000e+00> : vector<64x128xf32>
    %16 = tpu.matmul %14, %15, %cst_10 {dimension_numbers = #tpu.dot_dimension_numbers<[1], [0], [0], [1], [0, 0, 1, 1], [], []>} : vector<64x32xf32>, vector<32x128xf32>, vector<64x128xf32> -> vector<64x128xf32>
    %c0_11 = arith.constant 0 : index
    %c0_12 = arith.constant 0 : index
    %17 = vector.load %arg6[%c0_11, %c0_12] : memref<1x128xf32, #tpu.memory_space<vmem>>, vector<1x128xf32>
    %18 = vector.broadcast %17 : vector<1x128xf32> to vector<64x128xf32>
    %19 = arith.addf %16, %18 : vector<64x128xf32>
    %20 = vector.extract_strided_slice %19 {offsets = [0, 0], sizes = [64, 32], strides = [1, 1]} : vector<64x128xf32> to vector<64x32xf32>
    %21 = vector.shape_cast %20 : vector<64x32xf32> to vector<8x8x32xf32>
    %22 = vector.extract_strided_slice %19 {offsets = [0, 32], sizes = [64, 32], strides = [1, 1]} : vector<64x128xf32> to vector<64x32xf32>
    %23 = vector.shape_cast %22 : vector<64x32xf32> to vector<8x8x32xf32>
    %24 = vector.extract_strided_slice %19 {offsets = [0, 64], sizes = [64, 32], strides = [1, 1]} : vector<64x128xf32> to vector<64x32xf32>
    %25 = vector.shape_cast %24 : vector<64x32xf32> to vector<8x8x32xf32>
    %c0_13 = arith.constant 0 : index
    %c0_14 = arith.constant 0 : index
    %26 = vector.load %arg9[%c0_13, %c0_14] : memref<64x32xf32, #tpu.memory_space<vmem>>, vector<64x32xf32>
    %27 = vector.shape_cast %26 : vector<64x32xf32> to vector<1x64x32xf32>
    %28 = tpu.concatenate %23, %23, %23, %23, %23, %23, %23, %23 in 1 : vector<8x8x32xf32>, vector<8x8x32xf32>, vector<8x8x32xf32>, vector<8x8x32xf32>, vector<8x8x32xf32>, vector<8x8x32xf32>, vector<8x8x32xf32>, vector<8x8x32xf32> -> vector<8x64x32xf32>
    %29 = vector.broadcast %27 : vector<1x64x32xf32> to vector<8x64x32xf32>
    %30 = arith.mulf %28, %29 : vector<8x64x32xf32>
    %31 = tpu.concatenate %25, %25, %25, %25, %25, %25, %25, %25 in 1 : vector<8x8x32xf32>, vector<8x8x32xf32>, vector<8x8x32xf32>, vector<8x8x32xf32>, vector<8x8x32xf32>, vector<8x8x32xf32>, vector<8x8x32xf32>, vector<8x8x32xf32> -> vector<8x64x32xf32>
    %32 = vector.broadcast %27 : vector<1x64x32xf32> to vector<8x64x32xf32>
    %33 = arith.mulf %31, %32 : vector<8x64x32xf32>
    "tpu.trace_start"() <{level = 10 : i32, message = "bqd,bnd->bqn"}> : () -> ()
    %cst_15 = arith.constant dense<0.000000e+00> : vector<8x8x64xf32>
    %34 = tpu.matmul %21, %30, %cst_15 {dimension_numbers = #tpu.dot_dimension_numbers<[2], [2], [1], [1], [0, 0, 0, 1, 1, 1], [0], [0]>} : vector<8x8x32xf32>, vector<8x64x32xf32>, vector<8x8x64xf32> -> vector<8x8x64xf32>
    "tpu.trace_stop"() : () -> ()
    %cst_16 = arith.constant dense<0xFF800000> : vector<8x8xf32>
    %35 = vector.multi_reduction <maximumf>, %34, %cst_16 [2] : vector<8x8x64xf32> to vector<8x8xf32>
    %36 = vector.shape_cast %35 : vector<8x8xf32> to vector<8x8x1xf32>
    %37 = vector.broadcast %36 : vector<8x8x1xf32> to vector<8x8x64xf32>
    %38 = arith.subf %34, %37 : vector<8x8x64xf32>
    %39 = math.exp %38 : vector<8x8x64xf32>
    %40 = vector.shape_cast %39 : vector<8x8x64xf32> to vector<64x64xf32>
    %c0_17 = arith.constant 0 : index
    %c0_18 = arith.constant 0 : index
    %41 = vector.load %arg10[%c0_17, %c0_18] : memref<64x64xf32, #tpu.memory_space<vmem>>, vector<64x64xf32>
    %cst_19 = arith.constant dense<0.000000e+00> : vector<64x64xf32>
    %42 = tpu.matmul %40, %41, %cst_19 {dimension_numbers = #tpu.dot_dimension_numbers<[1], [0], [0], [1], [0, 0, 1, 1], [], []>} : vector<64x64xf32>, vector<64x64xf32>, vector<64x64xf32> -> vector<64x64xf32>
    %43 = vector.shape_cast %42 : vector<64x64xf32> to vector<8x8x64xf32>
    %44 = tpu.reciprocal %43 : vector<8x8x64xf32> -> vector<8x8x64xf32>
    %45 = arith.mulf %39, %44 : vector<8x8x64xf32>
    "tpu.trace_start"() <{level = 10 : i32, message = "bqn,bnd->bqd"}> : () -> ()
    %cst_20 = arith.constant dense<0.000000e+00> : vector<8x8x32xf32>
    %46 = tpu.matmul %45, %33, %cst_20 {dimension_numbers = #tpu.dot_dimension_numbers<[2], [1], [1], [2], [0, 0, 0, 1, 1, 2], [0], [0]>} : vector<8x8x64xf32>, vector<8x64x32xf32>, vector<8x8x32xf32> -> vector<8x8x32xf32>
    "tpu.trace_stop"() : () -> ()
    %47 = vector.shape_cast %46 : vector<8x8x32xf32> to vector<64x32xf32>
    %c0_21 = arith.constant 0 : index
    %c0_22 = arith.constant 0 : index
    %48 = vector.load %arg7[%c0_21, %c0_22] : memref<32x32xf32, #tpu.memory_space<vmem>>, vector<32x32xf32>
    %cst_23 = arith.constant dense<0.000000e+00> : vector<64x32xf32>
    %49 = tpu.matmul %47, %48, %cst_23 {dimension_numbers = #tpu.dot_dimension_numbers<[1], [0], [0], [1], [0, 0, 1, 1], [], []>} : vector<64x32xf32>, vector<32x32xf32>, vector<64x32xf32> -> vector<64x32xf32>
    %c0_24 = arith.constant 0 : index
    %c0_25 = arith.constant 0 : index
    %50 = vector.load %arg8[%c0_24, %c0_25] : memref<1x32xf32, #tpu.memory_space<vmem>>, vector<1x32xf32>
    %51 = vector.broadcast %50 : vector<1x32xf32> to vector<64x32xf32>
    %52 = arith.addf %49, %51 : vector<64x32xf32>
    %53 = vector.shape_cast %52 : vector<64x32xf32> to vector<8x8x32xf32>
    %54 = vector.extract_strided_slice %53 {offsets = [0, 0, 0], sizes = [8, 1, 32], strides = [1, 1, 1]} : vector<8x8x32xf32> to vector<8x1x32xf32>
    %55 = vector.shape_cast %54 : vector<8x1x32xf32> to vector<8x32xf32>
    %c0_26 = arith.constant 0 : index
    %c0_27 = arith.constant 0 : index
    %56 = vector.load %arg12[%c0_26, %c0_27] : memref<8x256xf32, #tpu.memory_space<vmem>>, vector<8x32xf32>
    tpu.vector_store %arg12[%c0_26, %c0_27], %55 {strides = array<i32>} : memref<8x256xf32, #tpu.memory_space<vmem>>, vector<8x32xf32>,
    %57 = vector.extract_strided_slice %53 {offsets = [0, 1, 0], sizes = [8, 1, 32], strides = [1, 1, 1]} : vector<8x8x32xf32> to vector<8x1x32xf32>
    %58 = vector.shape_cast %57 : vector<8x1x32xf32> to vector<8x32xf32>
    %c0_28 = arith.constant 0 : index
    %c32 = arith.constant 32 : index
    %59 = vector.load %arg12[%c0_28, %c32] : memref<8x256xf32, #tpu.memory_space<vmem>>, vector<8x32xf32>
    tpu.vector_store %arg12[%c0_28, %c32], %58 {strides = array<i32>} : memref<8x256xf32, #tpu.memory_space<vmem>>, vector<8x32xf32>,
    %60 = vector.extract_strided_slice %53 {offsets = [0, 2, 0], sizes = [8, 1, 32], strides = [1, 1, 1]} : vector<8x8x32xf32> to vector<8x1x32xf32>
    %61 = vector.shape_cast %60 : vector<8x1x32xf32> to vector<8x32xf32>
    %c0_29 = arith.constant 0 : index
    %c64 = arith.constant 64 : index
    %62 = vector.load %arg12[%c0_29, %c64] : memref<8x256xf32, #tpu.memory_space<vmem>>, vector<8x32xf32>
    tpu.vector_store %arg12[%c0_29, %c64], %61 {strides = array<i32>} : memref<8x256xf32, #tpu.memory_space<vmem>>, vector<8x32xf32>,
    %63 = vector.extract_strided_slice %53 {offsets = [0, 3, 0], sizes = [8, 1, 32], strides = [1, 1, 1]} : vector<8x8x32xf32> to vector<8x1x32xf32>
    %64 = vector.shape_cast %63 : vector<8x1x32xf32> to vector<8x32xf32>
    %c0_30 = arith.constant 0 : index
    %c96 = arith.constant 96 : index
    %65 = vector.load %arg12[%c0_30, %c96] : memref<8x256xf32, #tpu.memory_space<vmem>>, vector<8x32xf32>
    tpu.vector_store %arg12[%c0_30, %c96], %64 {strides = array<i32>} : memref<8x256xf32, #tpu.memory_space<vmem>>, vector<8x32xf32>,
    %66 = vector.extract_strided_slice %53 {offsets = [0, 4, 0], sizes = [8, 1, 32], strides = [1, 1, 1]} : vector<8x8x32xf32> to vector<8x1x32xf32>
    %67 = vector.shape_cast %66 : vector<8x1x32xf32> to vector<8x32xf32>
    %c0_31 = arith.constant 0 : index
    %c128 = arith.constant 128 : index
    %68 = vector.load %arg12[%c0_31, %c128] : memref<8x256xf32, #tpu.memory_space<vmem>>, vector<8x32xf32>
    tpu.vector_store %arg12[%c0_31, %c128], %67 {strides = array<i32>} : memref<8x256xf32, #tpu.memory_space<vmem>>, vector<8x32xf32>,
    %69 = vector.extract_strided_slice %53 {offsets = [0, 5, 0], sizes = [8, 1, 32], strides = [1, 1, 1]} : vector<8x8x32xf32> to vector<8x1x32xf32>
    %70 = vector.shape_cast %69 : vector<8x1x32xf32> to vector<8x32xf32>
    %c0_32 = arith.constant 0 : index
    %c160 = arith.constant 160 : index
    %71 = vector.load %arg12[%c0_32, %c160] : memref<8x256xf32, #tpu.memory_space<vmem>>, vector<8x32xf32>
    tpu.vector_store %arg12[%c0_32, %c160], %70 {strides = array<i32>} : memref<8x256xf32, #tpu.memory_space<vmem>>, vector<8x32xf32>,
    %72 = vector.extract_strided_slice %53 {offsets = [0, 6, 0], sizes = [8, 1, 32], strides = [1, 1, 1]} : vector<8x8x32xf32> to vector<8x1x32xf32>
    %73 = vector.shape_cast %72 : vector<8x1x32xf32> to vector<8x32xf32>
    %c0_33 = arith.constant 0 : index
    %c192 = arith.constant 192 : index
    %74 = vector.load %arg12[%c0_33, %c192] : memref<8x256xf32, #tpu.memory_space<vmem>>, vector<8x32xf32>
    tpu.vector_store %arg12[%c0_33, %c192], %73 {strides = array<i32>} : memref<8x256xf32, #tpu.memory_space<vmem>>, vector<8x32xf32>,
    %75 = vector.extract_strided_slice %53 {offsets = [0, 7, 0], sizes = [8, 1, 32], strides = [1, 1, 1]} : vector<8x8x32xf32> to vector<8x1x32xf32>
    %76 = vector.shape_cast %75 : vector<8x1x32xf32> to vector<8x32xf32>
    %c0_34 = arith.constant 0 : index
    %c224 = arith.constant 224 : index
    %77 = vector.load %arg12[%c0_34, %c224] : memref<8x256xf32, #tpu.memory_space<vmem>>, vector<8x32xf32>
    tpu.vector_store %arg12[%c0_34, %c224], %76 {strides = array<i32>} : memref<8x256xf32, #tpu.memory_space<vmem>>, vector<8x32xf32>,
    %78 = vector.shape_cast %45 : vector<8x8x64xf32> to vector<64x64xf32>
    %c0_35 = arith.constant 0 : index
    %c0_36 = arith.constant 0 : index
    %79 = vector.load %arg11[%c0_35, %c0_36] : memref<64x8xf32, #tpu.memory_space<vmem>>, vector<64x8xf32>
    %cst_37 = arith.constant dense<0.000000e+00> : vector<64x8xf32>
    %80 = tpu.matmul %78, %79, %cst_37 {dimension_numbers = #tpu.dot_dimension_numbers<[1], [0], [0], [1], [0, 0, 1, 1], [], []>} : vector<64x64xf32>, vector<64x8xf32>, vector<64x8xf32> -> vector<64x8xf32>
    %81 = vector.shape_cast %80 : vector<64x8xf32> to vector<8x8x8xf32>
    %c0_38 = arith.constant 0 : index
    %c0_39 = arith.constant 0 : index
    %c0_40 = arith.constant 0 : index
    %82 = vector.load %arg13[%c0_38, %c0_39, %c0_40] : memref<8x8x8xf32, #tpu.memory_space<vmem>>, vector<8x8x8xf32>
    tpu.vector_store %arg13[%c0_38, %c0_39, %c0_40], %81 {strides = array<i32>} : memref<8x8x8xf32, #tpu.memory_space<vmem>>, vector<8x8x8xf32>,
    return
  }
  func.func @transform_0(%arg0: i32) -> i32 {
    %c0_i32 = arith.constant 0 : i32
    %c0_i32_0 = arith.constant 0 : i32
    return %c0_i32 : i32
  }
  func.func @transform_1(%arg0: i32) -> (i32, i32, i32) {
    %c0_i32 = arith.constant 0 : i32
    %c0_i32_0 = arith.constant 0 : i32
    %c0_i32_1 = arith.constant 0 : i32
    return %arg0, %c0_i32, %c0_i32_0 : i32, i32, i32
  }
  func.func @transform_2(%arg0: i32) -> (i32, i32, i32) {
    %c0_i32 = arith.constant 0 : i32
    %c0_i32_0 = arith.constant 0 : i32
    %c0_i32_1 = arith.constant 0 : i32
    return %arg0, %c0_i32, %c0_i32_0 : i32, i32, i32
  }
  func.func @transform_3(%arg0: i32) -> (i32, i32) {
    %c0_i32 = arith.constant 0 : i32
    %c0_i32_0 = arith.constant 0 : i32
    %c0_i32_1 = arith.constant 0 : i32
    return %c0_i32, %c0_i32_0 : i32, i32
  }
  func.func @transform_4(%arg0: i32) -> (i32, i32) {
    %c0_i32 = arith.constant 0 : i32
    %c0_i32_0 = arith.constant 0 : i32
    %c0_i32_1 = arith.constant 0 : i32
    return %c0_i32, %c0_i32_0 : i32, i32
  }
  func.func @transform_5(%arg0: i32) -> (i32, i32) {
    %c0_i32 = arith.constant 0 : i32
    %c0_i32_0 = arith.constant 0 : i32
    %c0_i32_1 = arith.constant 0 : i32
    return %c0_i32, %c0_i32_0 : i32, i32
  }
  func.func @transform_6(%arg0: i32) -> (i32, i32) {
    %c0_i32 = arith.constant 0 : i32
    %c0_i32_0 = arith.constant 0 : i32
    %c0_i32_1 = arith.constant 0 : i32
    return %c0_i32, %c0_i32_0 : i32, i32
  }
  func.func @transform_7(%arg0: i32) -> (i32, i32) {
    %c0_i32 = arith.constant 0 : i32
    %c0_i32_0 = arith.constant 0 : i32
    %c0_i32_1 = arith.constant 0 : i32
    return %c0_i32, %c0_i32_0 : i32, i32
  }
  func.func @transform_8(%arg0: i32) -> (i32, i32) {
    %c0_i32 = arith.constant 0 : i32
    %c0_i32_0 = arith.constant 0 : i32
    %c0_i32_1 = arith.constant 0 : i32
    return %c0_i32, %c0_i32_0 : i32, i32
  }
  func.func @transform_9(%arg0: i32) -> (i32, i32) {
    %c0_i32 = arith.constant 0 : i32
    %c0_i32_0 = arith.constant 0 : i32
    %c0_i32_1 = arith.constant 0 : i32
    return %c0_i32, %c0_i32_0 : i32, i32
  }
  func.func @transform_10(%arg0: i32) -> (i32, i32) {
    %c0_i32 = arith.constant 0 : i32
    %c0_i32_0 = arith.constant 0 : i32
    %c0_i32_1 = arith.constant 0 : i32
    return %c0_i32, %c0_i32_0 : i32, i32
  }
  func.func @transform_11(%arg0: i32) -> (i32, i32) {
    %c0_i32 = arith.constant 0 : i32
    %c0_i32_0 = arith.constant 0 : i32
    return %arg0, %c0_i32 : i32, i32
  }
  func.func @transform_12(%arg0: i32) -> (i32, i32, i32) {
    %c0_i32 = arith.constant 0 : i32
    %c0_i32_0 = arith.constant 0 : i32
    %c0_i32_1 = arith.constant 0 : i32
    return %arg0, %c0_i32, %c0_i32_0 : i32, i32, i32
  }
}

</mosaic_0001>

<llo_original>
// kernel: tpu_custom_call.1
$region0: #{tpu_custom_call.1}
  #allocation0 [shape = 'u32[]', space=smem, size = 0x4, offset = 0x4, fixed_abs, tag = 'smem constant byte address 0x4 - core index']
  #allocation1 [shape = 'u32[144,128]{1,0:T(1,128)}', space=vmem, size = 0x12000, scoped, tag = 'internal scratch']
  #allocation2 [shape = 'f32[1]{0:T(128)S(6)}', space=smem, size = 0x200, scoped, tag = 'scoped memory for tpu_custom_call.1']
  %s0 = inlined_call_operand.<no memory space> [shape: f32[1], index: 0, kind: input, shape index: {}]
  %s1 = inlined_call_operand.vmem [shape: f32[8,8,32], index: 1, kind: input, shape index: {}]
  %s2 = inlined_call_operand.vmem [shape: f32[8,8,1], index: 2, kind: input, shape index: {}]
  %s3 = inlined_call_operand.vmem [shape: f32[8,32], index: 3, kind: input, shape index: {}]
  %s4 = inlined_call_operand.vmem [shape: f32[32,128], index: 4, kind: input, shape index: {}]
  %s5 = inlined_call_operand.vmem [shape: f32[1,128], index: 5, kind: input, shape index: {}]
  %s6 = inlined_call_operand.vmem [shape: f32[32,32], index: 6, kind: input, shape index: {}]
  %s7 = inlined_call_operand.vmem [shape: f32[1,32], index: 7, kind: input, shape index: {}]
  %s8 = inlined_call_operand.vmem [shape: f32[64,32], index: 8, kind: input, shape index: {}]
  %s9 = inlined_call_operand.vmem [shape: f32[64,64], index: 9, kind: input, shape index: {}]
  %s10 = inlined_call_operand.vmem [shape: f32[64,8], index: 10, kind: input, shape index: {}]
  %s11 = inlined_call_operand.hbm [shape: f32[8,256], index: 11, kind: output, shape index: {0}]
  %s12 = inlined_call_operand.hbm [shape: f32[8,8,8], index: 12, kind: output, shape index: {1}]
  %13 = xla_tuple %s11, %s12
  %s14 = sld [smem:[#allocation0]]
  $region62: #{tpu_custom_call.1} parent=0
    _
  %s16 = ssub.s32 1, %s14
  %s17 = scalar_select 0, %s16, %s14
  %18 = sst [smem:[#allocation2]] %s0
  $region1: #{tpu_custom_call.1} parent=0
    #allocation3 [shape = 'u8[8192]{0}', space=vmem, size = 0x2000, scoped, tag = 'output window, operand 0, single buffered']
    #allocation4 [shape = 's32[1]{0}', space=sflag, size = 0x4, scoped, tag = 'scoped memory for tpu_custom_call.1']
    #allocation5 [shape = 'u8[32768]{0}', space=vmem, size = 0x8000, scoped, tag = 'output window, operand 1, single buffered']
    #allocation6 [shape = 's32[1]{0}', space=sflag, size = 0x4, scoped, tag = 'scoped memory for tpu_custom_call.1']
    %19 = vsyncpa [#allocation4], 0
    %20 = vsyncpa [#allocation6], 0
    // Predicated region
    $region2: #{tpu_custom_call.1} parent=1 // pred_check
      _
    $region3: #{tpu_custom_call.1} parent=1 // pred_check_branch
      %22 = sbr.rel (0) target = $region5
    $region4: #{tpu_custom_call.1} parent=1 // pred_region
      _
    $region5: #{tpu_custom_call.1} parent=1 // pred_fallthru
      _
    // Predicated region
    $region6: #{tpu_custom_call.1} parent=1 // pred_check
      _
    $region7: #{tpu_custom_call.1} parent=1 // pred_check_branch
      %24 = sbr.rel (0) target = $region9
    $region8: #{tpu_custom_call.1} parent=1 // pred_region
      _
    $region9: #{tpu_custom_call.1} parent=1 // pred_fallthru
      _
    // Predicated region
    $region10: #{tpu_custom_call.1} parent=1 // pred_check
      _
    $region11: #{tpu_custom_call.1} parent=1 // pred_check_branch
      %26 = sbr.rel (0) target = $region13
    $region12: #{tpu_custom_call.1} parent=1 // pred_region
      _
    $region13: #{tpu_custom_call.1} parent=1 // pred_fallthru
      _
    // Predicated region
    $region14: #{tpu_custom_call.1} parent=1 // pred_check
      _
    $region15: #{tpu_custom_call.1} parent=1 // pred_check_branch
      %28 = sbr.rel (0) target = $region17
    $region16: #{tpu_custom_call.1} parent=1 // pred_region
      _
    $region17: #{tpu_custom_call.1} parent=1 // pred_fallthru
      _
    // Predicated region
    $region18: #{tpu_custom_call.1} parent=1 // pred_check
      _
    $region19: #{tpu_custom_call.1} parent=1 // pred_check_branch
      %30 = sbr.rel (0) target = $region21
    $region20: #{tpu_custom_call.1} parent=1 // pred_region
      _
    $region21: #{tpu_custom_call.1} parent=1 // pred_fallthru
      _
    // Predicated region
    $region22: #{tpu_custom_call.1} parent=1 // pred_check
      _
    $region23: #{tpu_custom_call.1} parent=1 // pred_check_branch
      %32 = sbr.rel (0) target = $region25
    $region24: #{tpu_custom_call.1} parent=1 // pred_region
      _
    $region25: #{tpu_custom_call.1} parent=1 // pred_fallthru
      _
    // Predicated region
    $region26: #{tpu_custom_call.1} parent=1 // pred_check
      _
    $region27: #{tpu_custom_call.1} parent=1 // pred_check_branch
      %34 = sbr.rel (0) target = $region29
    $region28: #{tpu_custom_call.1} parent=1 // pred_region
      _
    $region29: #{tpu_custom_call.1} parent=1 // pred_fallthru
      _
    // Predicated region
    $region30: #{tpu_custom_call.1} parent=1 // pred_check
      _
    $region31: #{tpu_custom_call.1} parent=1 // pred_check_branch
      %36 = sbr.rel (0) target = $region33
    $region32: #{tpu_custom_call.1} parent=1 // pred_region
      _
    $region33: #{tpu_custom_call.1} parent=1 // pred_fallthru
      _
    // Predicated region
    $region34: #{tpu_custom_call.1} parent=1 // pred_check
      _
    $region35: #{tpu_custom_call.1} parent=1 // pred_check_branch
      %38 = sbr.rel (0) target = $region37
    $region36: #{tpu_custom_call.1} parent=1 // pred_region
      _
    $region37: #{tpu_custom_call.1} parent=1 // pred_fallthru
      _
    // Predicated region
    $region38: #{tpu_custom_call.1} parent=1 // pred_check
      _
    $region39: #{tpu_custom_call.1} parent=1 // pred_check_branch
      %40 = sbr.rel (0) target = $region41
    $region40: #{tpu_custom_call.1} parent=1 // pred_region
      _
    $region41: #{tpu_custom_call.1} parent=1 // pred_fallthru
      _
    // Predicated region
    $region42: #{tpu_custom_call.1} parent=1 // pred_check
      _
    $region43: #{tpu_custom_call.1} parent=1 // pred_check_branch
      %42 = sbr.rel (0) target = $region45
    $region44: #{tpu_custom_call.1} parent=1 // pred_region
      _
    $region45: #{tpu_custom_call.1} parent=1 // pred_fallthru
      _
    %s43 = sld [smem:[#allocation2]]
    %v44 = vld [vmem:[%s2] sm:$0xff]
    %v45 = vld [vmem:[%s2 + $0x8] sm:$0xff]
    %v46 = vld [vmem:[%s2 + $0x10] sm:$0xff]
    %v47 = vld [vmem:[%s2 + $0x18] sm:$0xff]
    %v48 = vld [vmem:[%s2 + $0x20] sm:$0xff]
    %v49 = vld [vmem:[%s2 + $0x28] sm:$0xff]
    %v50 = vld [vmem:[%s2 + $0x30] sm:$0xff]
    %v51 = vld [vmem:[%s2 + $0x38] sm:$0xff]
    %v52 = vstv %s43
    %v53 = vsub.f32 %v52, %v44
    %v54 = vsub.f32 %v52, %v45
    %v55 = vsub.f32 %v52, %v46
    %v56 = vsub.f32 %v52, %v47
    %v57 = vsub.f32 %v52, %v48
    %v58 = vsub.f32 %v52, %v49
    %v59 = vsub.f32 %v52, %v50
    %v60 = vsub.f32 %v52, %v51
    %v61 = vmul.f32 %v53, 0.00027777778
    %v62 = vmul.f32 %v54, 0.00027777778
    %v63 = vmul.f32 %v55, 0.00027777778
    %v64 = vmul.f32 %v56, 0.00027777778
    %v65 = vmul.f32 %v57, 0.00027777778
    %v66 = vmul.f32 %v58, 0.00027777778
    %v67 = vmul.f32 %v59, 0.00027777778
    %v68 = vmul.f32 %v60, 0.00027777778
    %v69 = vmul.f32 %v61, 1.442695
    %v70 = vpow.pop %v69
    %v71 = vmul.f32 %v62, 1.442695
    %v72 = vpow.pop %v71
    %v73 = vmul.f32 %v63, 1.442695
    %v74 = vpow.pop %v73
    %v75 = vmul.f32 %v64, 1.442695
    %v76 = vpow.pop %v75
    %v77 = vmul.f32 %v65, 1.442695
    %v78 = vpow.pop %v77
    %v79 = vmul.f32 %v66, 1.442695
    %v80 = vpow.pop %v79
    %v81 = vmul.f32 %v67, 1.442695
    %v82 = vpow.pop %v81
    %v83 = vmul.f32 %v68, 1.442695
    %v84 = vpow.pop %v83
    %v85 = vld [vmem:[%s1] sm:$0xff]
    %v86 = vld [vmem:[%s1 + $0x8] sm:$0xff]
    %v87 = vld [vmem:[%s1 + $0x10] sm:$0xff]
    %v88 = vld [vmem:[%s1 + $0x18] sm:$0xff]
    %v89 = vld [vmem:[%s1 + $0x20] sm:$0xff]
    %v90 = vld [vmem:[%s1 + $0x28] sm:$0xff]
    %v91 = vld [vmem:[%s1 + $0x30] sm:$0xff]
    %v92 = vld [vmem:[%s1 + $0x38] sm:$0xff]
    %v93 = vld [vmem:[%s3] sm:$0xff]
    %v94 = vadd.f32 %v85, %v93
    %v95 = vadd.f32 %v86, %v93
    %v96 = vadd.f32 %v87, %v93
    %v97 = vadd.f32 %v88, %v93
    %v98 = vadd.f32 %v89, %v93
    %v99 = vadd.f32 %v90, %v93
    %v100 = vadd.f32 %v91, %v93
    %v101 = vadd.f32 %v92, %v93
    %103 = vset.pattern.permute.xlu0 0
    %104 = vperm.xlu0 %103, %v70
    %v105 = vpop.permute.xlu0 %104
    %108 = vset.pattern.permute.xlu0 0
    %109 = vperm.xlu0 %108, %v72
    %v110 = vpop.permute.xlu0 %109
    %113 = vset.pattern.permute.xlu0 0
    %114 = vperm.xlu0 %113, %v74
    %v115 = vpop.permute.xlu0 %114
    %118 = vset.pattern.permute.xlu0 0
    %119 = vperm.xlu0 %118, %v76
    %v120 = vpop.permute.xlu0 %119
    %123 = vset.pattern.permute.xlu0 0
    %124 = vperm.xlu0 %123, %v78
    %v125 = vpop.permute.xlu0 %124
    %128 = vset.pattern.permute.xlu0 0
    %129 = vperm.xlu0 %128, %v80
    %v130 = vpop.permute.xlu0 %129
    %133 = vset.pattern.permute.xlu0 0
    %134 = vperm.xlu0 %133, %v82
    %v135 = vpop.permute.xlu0 %134
    %138 = vset.pattern.permute.xlu0 0
    %139 = vperm.xlu0 %138, %v84
    %v140 = vpop.permute.xlu0 %139
    %v142 = vmul.f32 %v94, %v105
    %v143 = vmul.f32 %v95, %v110
    %v144 = vmul.f32 %v96, %v115
    %v145 = vmul.f32 %v97, %v120
    %v146 = vmul.f32 %v98, %v125
    %v147 = vmul.f32 %v99, %v130
    %v148 = vmul.f32 %v100, %v135
    %v149 = vmul.f32 %v101, %v140
    %v150 = vld [vmem:[%s4] sm:$0xff]
    %v151 = vld [vmem:[%s4 + $0x8] sm:$0xff]
    %v152 = vld [vmem:[%s4 + $0x10] sm:$0xff]
    %v153 = vld [vmem:[%s4 + $0x18] sm:$0xff]
    %v154 = vld [vmem:[%s5] sm:$0x1]
    %v156 = vlaneseq
    %v157 = vshrl.u32 %v156, 7
    %v158 = vsub.s32 0, %v157
    %v159 = vrot.slane %v154, %v158
    %vm161 = vcmask 261120
    %v163 = vsel %vm161, %v142, 0
    %v166 = vsel %vm161, %v143, 0
    %v169 = vsel %vm161, %v144, 0
    %v172 = vsel %vm161, %v145, 0
    %v175 = vsel %vm161, %v146, 0
    %v178 = vsel %vm161, %v147, 0
    %v181 = vsel %vm161, %v148, 0
    %v184 = vsel %vm161, %v149, 0
    %186 = vmatprep.subr.mxu0 0.0
    %187 = vmatpush1.msra.mxu0 %v150
    %188 = vmatprep.subr.mxu0 0.0
    %189 = vmatpush1.msra.mxu0 %v151
    %190 = vmatprep.subr.mxu0 0.0
    %191 = vmatpush1.msra.mxu0 %v152
    %192 = vmatprep.subr.mxu0 0.0
    %193 = vmatpush1.msra.mxu0 %v153
    %194 = vmatprep.subr.mxu0 0.0
    %195 = vmatpush1.msra.mxu0 0.0
    %196 = vmatprep.subr.mxu0 0.0
    %197 = vmatpush1.msra.mxu0 0.0
    %198 = vmatprep.subr.mxu0 0.0
    %199 = vmatpush1.msra.mxu0 0.0
    %200 = vmatprep.subr.mxu0 0.0
    %201 = vmatpush1.msra.mxu0 0.0
    %202 = vmatprep.subr.mxu0 0.0
    %203 = vmatpush1.msra.mxu0 0.0
    %204 = vmatprep.subr.mxu0 0.0
    %205 = vmatpush1.msra.mxu0 0.0
    %206 = vmatprep.subr.mxu0 0.0
    %207 = vmatpush1.msra.mxu0 0.0
    %208 = vmatprep.subr.mxu0 0.0
    %209 = vmatpush1.msra.mxu0 0.0
    %210 = vmatprep.subr.mxu0 0.0
    %211 = vmatpush1.msra.mxu0 0.0
    %212 = vmatprep.subr.mxu0 0.0
    %213 = vmatpush1.msra.mxu0 0.0
    %214 = vmatprep.subr.mxu0 0.0
    %215 = vmatpush1.msra.mxu0 0.0
    %216 = vmatprep.subr.mxu0 0.0
    %217 = vmatpush1.msra.mxu0 0.0
    %218 = vmatprep.subr.mxu0 0.0
    %219 = vmatpush1.msra.mxu0 0.0
    %220 = vmatprep.subr.mxu0 0.0
    %221 = vmatpush1.msra.mxu0 0.0
    %222 = vmatprep.subr.mxu0 0.0
    %223 = vmatpush1.msra.mxu0 0.0
    %224 = vmatprep.subr.mxu0 0.0
    %225 = vmatpush1.msra.mxu0 0.0
    %226 = vmatprep.subr.mxu0 0.0
    %227 = vmatpush1.msra.mxu0 0.0
    %228 = vmatprep.subr.mxu0 0.0
    %229 = vmatpush1.msra.mxu0 0.0
    %230 = vmatprep.subr.mxu0 0.0
    %231 = vmatpush1.msra.mxu0 0.0
    %232 = vmatprep.subr.mxu0 0.0
    %233 = vmatpush1.msra.mxu0 0.0
    %234 = vmatprep.subr.mxu0 0.0
    %235 = vmatpush1.msra.mxu0 0.0
    %236 = vmatprep.subr.mxu0 0.0
    %237 = vmatpush1.msra.mxu0 0.0
    %238 = vmatprep.subr.mxu0 0.0
    %239 = vmatpush1.msra.mxu0 0.0
    %240 = vmatprep.subr.mxu0 0.0
    %241 = vmatpush1.msra.mxu0 0.0
    %242 = vmatprep.subr.mxu0 0.0
    %243 = vmatpush1.msra.mxu0 0.0
    %244 = vmatprep.subr.mxu0 0.0
    %245 = vmatpush1.msra.mxu0 0.0
    %246 = vmatprep.subr.mxu0 0.0
    %247 = vmatpush1.msra.mxu0 0.0
    %248 = vmatprep.subr.mxu0 0.0
    %249 = vmatpush1.msra.mxu0 0.0
    %250 = vmatprep.mubr.f32.mxu0 0.0
    %251 = vmatmul.mubr.f32.gmra.mrb[0].mxu0 %v163
    %v252 = vpop.f32.mrb[0].mxu0
    %v253 = vadd.f32 %v159, %v252
    %v254 = vpop.f32.mrb[0].mxu0
    %255 = vmatprep.mubr.f32.mxu0 0.0
    %256 = vmatmul.mubr.f32.gmra.mrb[0].mxu0 %v166
    %v257 = vpop.f32.mrb[0].mxu0
    %v258 = vadd.f32 %v159, %v257
    %v259 = vpop.f32.mrb[0].mxu0
    %260 = vmatprep.mubr.f32.mxu0 0.0
    %261 = vmatmul.mubr.f32.gmra.mrb[0].mxu0 %v169
    %v262 = vpop.f32.mrb[0].mxu0
    %v263 = vadd.f32 %v159, %v262
    %v264 = vpop.f32.mrb[0].mxu0
    %265 = vmatprep.mubr.f32.mxu0 0.0
    %266 = vmatmul.mubr.f32.gmra.mrb[0].mxu0 %v172
    %v267 = vpop.f32.mrb[0].mxu0
    %v268 = vadd.f32 %v159, %v267
    %v269 = vpop.f32.mrb[0].mxu0
    %270 = vmatprep.mubr.f32.mxu0 0.0
    %271 = vmatmul.mubr.f32.gmra.mrb[0].mxu0 %v175
    %v272 = vpop.f32.mrb[0].mxu0
    %v273 = vadd.f32 %v159, %v272
    %v274 = vpop.f32.mrb[0].mxu0
    %275 = vmatprep.mubr.f32.mxu0 0.0
    %276 = vmatmul.mubr.f32.gmra.mrb[0].mxu0 %v178
    %v277 = vpop.f32.mrb[0].mxu0
    %v278 = vadd.f32 %v159, %v277
    %v279 = vpop.f32.mrb[0].mxu0
    %280 = vmatprep.mubr.f32.mxu0 0.0
    %281 = vmatmul.mubr.f32.gmra.mrb[0].mxu0 %v181
    %v282 = vpop.f32.mrb[0].mxu0
    %v283 = vadd.f32 %v159, %v282
    %v284 = vpop.f32.mrb[0].mxu0
    %285 = vmatprep.mubr.f32.mxu0 0.0
    %286 = vmatmul.mubr.f32.gmra.mrb[0].mxu0 %v184
    %v287 = vpop.f32.mrb[0].mxu0
    %v288 = vadd.f32 %v159, %v287
    %v289 = vpop.f32.mrb[0].mxu0
    %290 = vdwg.mxu0
    %v291 = vld [vmem:[%s8] sm:$0xff]
    %v292 = vld [vmem:[%s8 + $0x8] sm:$0xff]
    %v293 = vld [vmem:[%s8 + $0x10] sm:$0xff]
    %v294 = vld [vmem:[%s8 + $0x18] sm:$0xff]
    %v295 = vld [vmem:[%s8 + $0x20] sm:$0xff]
    %v296 = vld [vmem:[%s8 + $0x28] sm:$0xff]
    %v297 = vld [vmem:[%s8 + $0x30] sm:$0xff]
    %v298 = vld [vmem:[%s8 + $0x38] sm:$0xff]
    %307 = vrot.lane.b32.xlu0 %v291, 32
    %v308 = vpop.permute.xlu0 %307
    %309 = vrot.lane.b32.xlu0 %v292, 32
    %v310 = vpop.permute.xlu0 %309
    %311 = vrot.lane.b32.xlu0 %v293, 32
    %v312 = vpop.permute.xlu0 %311
    %313 = vrot.lane.b32.xlu0 %v294, 32
    %v314 = vpop.permute.xlu0 %313
    %315 = vrot.lane.b32.xlu0 %v295, 32
    %v316 = vpop.permute.xlu0 %315
    %317 = vrot.lane.b32.xlu0 %v296, 32
    %v318 = vpop.permute.xlu0 %317
    %319 = vrot.lane.b32.xlu0 %v297, 32
    %v320 = vpop.permute.xlu0 %319
    %321 = vrot.lane.b32.xlu0 %v298, 32
    %v322 = vpop.permute.xlu0 %321
    %v331 = vmul.f32 %v253, %v308
    %v332 = vmul.f32 %v253, %v310
    %v333 = vmul.f32 %v253, %v312
    %v334 = vmul.f32 %v253, %v314
    %v335 = vmul.f32 %v253, %v316
    %v336 = vmul.f32 %v253, %v318
    %v337 = vmul.f32 %v253, %v320
    %v338 = vmul.f32 %v253, %v322
    %v339 = vmul.f32 %v258, %v308
    %v340 = vmul.f32 %v258, %v310
    %v341 = vmul.f32 %v258, %v312
    %v342 = vmul.f32 %v258, %v314
    %v343 = vmul.f32 %v258, %v316
    %v344 = vmul.f32 %v258, %v318
    %v345 = vmul.f32 %v258, %v320
    %v346 = vmul.f32 %v258, %v322
    %v347 = vmul.f32 %v263, %v308
    %v348 = vmul.f32 %v263, %v310
    %v349 = vmul.f32 %v263, %v312
    %v350 = vmul.f32 %v263, %v314
    %v351 = vmul.f32 %v263, %v316
    %v352 = vmul.f32 %v263, %v318
    %v353 = vmul.f32 %v263, %v320
    %v354 = vmul.f32 %v263, %v322
    %v355 = vmul.f32 %v268, %v308
    %v356 = vmul.f32 %v268, %v310
    %v357 = vmul.f32 %v268, %v312
    %v358 = vmul.f32 %v268, %v314
    %v359 = vmul.f32 %v268, %v316
    %v360 = vmul.f32 %v268, %v318
    %v361 = vmul.f32 %v268, %v320
    %v362 = vmul.f32 %v268, %v322
    %v363 = vmul.f32 %v273, %v308
    %v364 = vmul.f32 %v273, %v310
    %v365 = vmul.f32 %v273, %v312
    %v366 = vmul.f32 %v273, %v314
    %v367 = vmul.f32 %v273, %v316
    %v368 = vmul.f32 %v273, %v318
    %v369 = vmul.f32 %v273, %v320
    %v370 = vmul.f32 %v273, %v322
    %v371 = vmul.f32 %v278, %v308
    %v372 = vmul.f32 %v278, %v310
    %v373 = vmul.f32 %v278, %v312
    %v374 = vmul.f32 %v278, %v314
    %v375 = vmul.f32 %v278, %v316
    %v376 = vmul.f32 %v278, %v318
    %v377 = vmul.f32 %v278, %v320
    %v378 = vmul.f32 %v278, %v322
    %v379 = vmul.f32 %v283, %v308
    %v380 = vmul.f32 %v283, %v310
    %v381 = vmul.f32 %v283, %v312
    %v382 = vmul.f32 %v283, %v314
    %v383 = vmul.f32 %v283, %v316
    %v384 = vmul.f32 %v283, %v318
    %v385 = vmul.f32 %v283, %v320
    %v386 = vmul.f32 %v283, %v322
    %v387 = vmul.f32 %v288, %v308
    %v388 = vmul.f32 %v288, %v310
    %v389 = vmul.f32 %v288, %v312
    %v390 = vmul.f32 %v288, %v314
    %v391 = vmul.f32 %v288, %v316
    %v392 = vmul.f32 %v288, %v318
    %v393 = vmul.f32 %v288, %v320
    %v394 = vmul.f32 %v288, %v322
    %395 = vrot.lane.b32.xlu0 %v291, 64
    %v396 = vpop.permute.xlu0 %395
    %397 = vrot.lane.b32.xlu0 %v292, 64
    %v398 = vpop.permute.xlu0 %397
    %399 = vrot.lane.b32.xlu0 %v293, 64
    %v400 = vpop.permute.xlu0 %399
    %401 = vrot.lane.b32.xlu0 %v294, 64
    %v402 = vpop.permute.xlu0 %401
    %403 = vrot.lane.b32.xlu0 %v295, 64
    %v404 = vpop.permute.xlu0 %403
    %405 = vrot.lane.b32.xlu0 %v296, 64
    %v406 = vpop.permute.xlu0 %405
    %407 = vrot.lane.b32.xlu0 %v297, 64
    %v408 = vpop.permute.xlu0 %407
    %409 = vrot.lane.b32.xlu0 %v298, 64
    %v410 = vpop.permute.xlu0 %409
    %v419 = vmul.f32 %v253, %v396
    %v420 = vmul.f32 %v253, %v398
    %v421 = vmul.f32 %v253, %v400
    %v422 = vmul.f32 %v253, %v402
    %v423 = vmul.f32 %v253, %v404
    %v424 = vmul.f32 %v253, %v406
    %v425 = vmul.f32 %v253, %v408
    %v426 = vmul.f32 %v253, %v410
    %v427 = vmul.f32 %v258, %v396
    %v428 = vmul.f32 %v258, %v398
    %v429 = vmul.f32 %v258, %v400
    %v430 = vmul.f32 %v258, %v402
    %v431 = vmul.f32 %v258, %v404
    %v432 = vmul.f32 %v258, %v406
    %v433 = vmul.f32 %v258, %v408
    %v434 = vmul.f32 %v258, %v410
    %v435 = vmul.f32 %v263, %v396
    %v436 = vmul.f32 %v263, %v398
    %v437 = vmul.f32 %v263, %v400
    %v438 = vmul.f32 %v263, %v402
    %v439 = vmul.f32 %v263, %v404
    %v440 = vmul.f32 %v263, %v406
    %v441 = vmul.f32 %v263, %v408
    %v442 = vmul.f32 %v263, %v410
    %v443 = vmul.f32 %v268, %v396
    %v444 = vmul.f32 %v268, %v398
    %v445 = vmul.f32 %v268, %v400
    %v446 = vmul.f32 %v268, %v402
    %v447 = vmul.f32 %v268, %v404
    %v448 = vmul.f32 %v268, %v406
    %v449 = vmul.f32 %v268, %v408
    %v450 = vmul.f32 %v268, %v410
    %v451 = vmul.f32 %v273, %v396
    %v452 = vmul.f32 %v273, %v398
    %v453 = vmul.f32 %v273, %v400
    %v454 = vmul.f32 %v273, %v402
    %v455 = vmul.f32 %v273, %v404
    %v456 = vmul.f32 %v273, %v406
    %v457 = vmul.f32 %v273, %v408
    %v458 = vmul.f32 %v273, %v410
    %v459 = vmul.f32 %v278, %v396
    %v460 = vmul.f32 %v278, %v398
    %v461 = vmul.f32 %v278, %v400
    %v462 = vmul.f32 %v278, %v402
    %v463 = vmul.f32 %v278, %v404
    %v464 = vmul.f32 %v278, %v406
    %v465 = vmul.f32 %v278, %v408
    %v466 = vmul.f32 %v278, %v410
    %v467 = vmul.f32 %v283, %v396
    %v468 = vmul.f32 %v283, %v398
    %v469 = vmul.f32 %v283, %v400
    %v470 = vmul.f32 %v283, %v402
    %v471 = vmul.f32 %v283, %v404
    %v472 = vmul.f32 %v283, %v406
    %v473 = vmul.f32 %v283, %v408
    %v474 = vmul.f32 %v283, %v410
    %v475 = vmul.f32 %v288, %v396
    %v476 = vmul.f32 %v288, %v398
    %v477 = vmul.f32 %v288, %v400
    %v478 = vmul.f32 %v288, %v402
    %v479 = vmul.f32 %v288, %v404
    %v480 = vmul.f32 %v288, %v406
    %v481 = vmul.f32 %v288, %v408
    %v482 = vmul.f32 %v288, %v410
    %491 = vrot.lane.b32.xlu0 %v331, 96
    %v492 = vpop.permute.xlu0 %491
    %493 = vrot.lane.b32.xlu0 %v332, 96
    %v494 = vpop.permute.xlu0 %493
    %495 = vrot.lane.b32.xlu0 %v333, 96
    %v496 = vpop.permute.xlu0 %495
    %497 = vrot.lane.b32.xlu0 %v334, 96
    %v498 = vpop.permute.xlu0 %497
    %499 = vrot.lane.b32.xlu0 %v335, 96
    %v500 = vpop.permute.xlu0 %499
    %501 = vrot.lane.b32.xlu0 %v336, 96
    %v502 = vpop.permute.xlu0 %501
    %503 = vrot.lane.b32.xlu0 %v337, 96
    %v504 = vpop.permute.xlu0 %503
    %505 = vrot.lane.b32.xlu0 %v338, 96
    %v506 = vpop.permute.xlu0 %505
    %v508 = vsel %vm161, %v253, 0
    %v510 = vsel %vm161, %v492, 0
    %v512 = vsel %vm161, %v494, 0
    %v514 = vsel %vm161, %v496, 0
    %v516 = vsel %vm161, %v498, 0
    %v518 = vsel %vm161, %v500, 0
    %v520 = vsel %vm161, %v502, 0
    %v522 = vsel %vm161, %v504, 0
    %v524 = vsel %vm161, %v506, 0
    %526 = vmatprep.subr.mxu0 0.0
    %527 = vmatpush1.xpose.msra.mxu0 %v510
    %528 = vmatprep.subr.mxu0 0.0
    %529 = vmatpush1.xpose.msra.mxu0 %v512
    %530 = vmatprep.subr.mxu0 0.0
    %531 = vmatpush1.xpose.msra.mxu0 %v514
    %532 = vmatprep.subr.mxu0 0.0
    %533 = vmatpush1.xpose.msra.mxu0 %v516
    %534 = vmatprep.subr.mxu0 0.0
    %535 = vmatpush1.xpose.msra.mxu0 %v518
    %536 = vmatprep.subr.mxu0 0.0
    %537 = vmatpush1.xpose.msra.mxu0 %v520
    %538 = vmatprep.subr.mxu0 0.0
    %539 = vmatpush1.xpose.msra.mxu0 %v522
    %540 = vmatprep.subr.mxu0 0.0
    %541 = vmatpush1.xpose.msra.mxu0 %v524
    %542 = vmatprep.subr.mxu0 0.0
    %543 = vmatpush1.xpose.msra.mxu0 0.0
    %544 = vmatprep.subr.mxu0 0.0
    %545 = vmatpush1.xpose.msra.mxu0 0.0
    %546 = vmatprep.subr.mxu0 0.0
    %547 = vmatpush1.xpose.msra.mxu0 0.0
    %548 = vmatprep.subr.mxu0 0.0
    %549 = vmatpush1.xpose.msra.mxu0 0.0
    %550 = vmatprep.subr.mxu0 0.0
    %551 = vmatpush1.xpose.msra.mxu0 0.0
    %552 = vmatprep.subr.mxu0 0.0
    %553 = vmatpush1.xpose.msra.mxu0 0.0
    %554 = vmatprep.subr.mxu0 0.0
    %555 = vmatpush1.xpose.msra.mxu0 0.0
    %556 = vmatprep.subr.mxu0 0.0
    %557 = vmatpush1.xpose.msra.mxu0 0.0
    %558 = vmatprep.subr.mxu0 0.0
    %559 = vmatpush1.xpose.msra.mxu0 0.0
    %560 = vmatprep.subr.mxu0 0.0
    %561 = vmatpush1.xpose.msra.mxu0 0.0
    %562 = vmatprep.subr.mxu0 0.0
    %563 = vmatpush1.xpose.msra.mxu0 0.0
    %564 = vmatprep.subr.mxu0 0.0
    %565 = vmatpush1.xpose.msra.mxu0 0.0
    %566 = vmatprep.subr.mxu0 0.0
    %567 = vmatpush1.xpose.msra.mxu0 0.0
    %568 = vmatprep.subr.mxu0 0.0
    %569 = vmatpush1.xpose.msra.mxu0 0.0
    %570 = vmatprep.subr.mxu0 0.0
    %571 = vmatpush1.xpose.msra.mxu0 0.0
    %572 = vmatprep.subr.mxu0 0.0
    %573 = vmatpush1.xpose.msra.mxu0 0.0
    %574 = vmatprep.subr.mxu0 0.0
    %575 = vmatpush1.xpose.msra.mxu0 0.0
    %576 = vmatprep.subr.mxu0 0.0
    %577 = vmatpush1.xpose.msra.mxu0 0.0
    %578 = vmatprep.subr.mxu0 0.0
    %579 = vmatpush1.xpose.msra.mxu0 0.0
    %580 = vmatprep.subr.mxu0 0.0
    %581 = vmatpush1.xpose.msra.mxu0 0.0
    %582 = vmatprep.subr.mxu0 0.0
    %583 = vmatpush1.xpose.msra.mxu0 0.0
    %584 = vmatprep.subr.mxu0 0.0
    %585 = vmatpush1.xpose.msra.mxu0 0.0
    %586 = vmatprep.subr.mxu0 0.0
    %587 = vmatpush1.xpose.msra.mxu0 0.0
    %588 = vmatprep.subr.mxu0 0.0
    %589 = vmatpush1.xpose.msra.mxu0 0.0
    %590 = vmatprep.mubr.f32.mxu0 0.0
    %591 = vmatmul.mubr.f32.gmra.mrb[0].mxu0 %v508
    %v592 = vpop.f32.mrb[0].mxu0
    %v593 = vadd.f32 0.0, %v592
    %v594 = vpop.f32.mrb[0].mxu0
    %595 = vdwg.mxu0
    %604 = vrot.lane.b32.xlu0 %v339, 96
    %v605 = vpop.permute.xlu0 %604
    %606 = vrot.lane.b32.xlu0 %v340, 96
    %v607 = vpop.permute.xlu0 %606
    %608 = vrot.lane.b32.xlu0 %v341, 96
    %v609 = vpop.permute.xlu0 %608
    %610 = vrot.lane.b32.xlu0 %v342, 96
    %v611 = vpop.permute.xlu0 %610
    %612 = vrot.lane.b32.xlu0 %v343, 96
    %v613 = vpop.permute.xlu0 %612
    %614 = vrot.lane.b32.xlu0 %v344, 96
    %v615 = vpop.permute.xlu0 %614
    %616 = vrot.lane.b32.xlu0 %v345, 96
    %v617 = vpop.permute.xlu0 %616
    %618 = vrot.lane.b32.xlu0 %v346, 96
    %v619 = vpop.permute.xlu0 %618
    %v621 = vsel %vm161, %v258, 0
    %v623 = vsel %vm161, %v605, 0
    %v625 = vsel %vm161, %v607, 0
    %v627 = vsel %vm161, %v609, 0
    %v629 = vsel %vm161, %v611, 0
    %v631 = vsel %vm161, %v613, 0
    %v633 = vsel %vm161, %v615, 0
    %v635 = vsel %vm161, %v617, 0
    %v637 = vsel %vm161, %v619, 0
    %639 = vmatprep.subr.mxu0 0.0
    %640 = vmatpush1.xpose.msra.mxu0 %v623
    %641 = vmatprep.subr.mxu0 0.0
    %642 = vmatpush1.xpose.msra.mxu0 %v625
    %643 = vmatprep.subr.mxu0 0.0
    %644 = vmatpush1.xpose.msra.mxu0 %v627
    %645 = vmatprep.subr.mxu0 0.0
    %646 = vmatpush1.xpose.msra.mxu0 %v629
    %647 = vmatprep.subr.mxu0 0.0
    %648 = vmatpush1.xpose.msra.mxu0 %v631
    %649 = vmatprep.subr.mxu0 0.0
    %650 = vmatpush1.xpose.msra.mxu0 %v633
    %651 = vmatprep.subr.mxu0 0.0
    %652 = vmatpush1.xpose.msra.mxu0 %v635
    %653 = vmatprep.subr.mxu0 0.0
    %654 = vmatpush1.xpose.msra.mxu0 %v637
    %655 = vmatprep.subr.mxu0 0.0
    %656 = vmatpush1.xpose.msra.mxu0 0.0
    %657 = vmatprep.subr.mxu0 0.0
    %658 = vmatpush1.xpose.msra.mxu0 0.0
    %659 = vmatprep.subr.mxu0 0.0
    %660 = vmatpush1.xpose.msra.mxu0 0.0
    %661 = vmatprep.subr.mxu0 0.0
    %662 = vmatpush1.xpose.msra.mxu0 0.0
    %663 = vmatprep.subr.mxu0 0.0
    %664 = vmatpush1.xpose.msra.mxu0 0.0
    %665 = vmatprep.subr.mxu0 0.0
    %666 = vmatpush1.xpose.msra.mxu0 0.0
    %667 = vmatprep.subr.mxu0 0.0
    %668 = vmatpush1.xpose.msra.mxu0 0.0
    %669 = vmatprep.subr.mxu0 0.0
    %670 = vmatpush1.xpose.msra.mxu0 0.0
    %671 = vmatprep.subr.mxu0 0.0
    %672 = vmatpush1.xpose.msra.mxu0 0.0
    %673 = vmatprep.subr.mxu0 0.0
    %674 = vmatpush1.xpose.msra.mxu0 0.0
    %675 = vmatprep.subr.mxu0 0.0
    %676 = vmatpush1.xpose.msra.mxu0 0.0
    %677 = vmatprep.subr.mxu0 0.0
    %678 = vmatpush1.xpose.msra.mxu0 0.0
    %679 = vmatprep.subr.mxu0 0.0
    %680 = vmatpush1.xpose.msra.mxu0 0.0
    %681 = vmatprep.subr.mxu0 0.0
    %682 = vmatpush1.xpose.msra.mxu0 0.0
    %683 = vmatprep.subr.mxu0 0.0
    %684 = vmatpush1.xpose.msra.mxu0 0.0
    %685 = vmatprep.subr.mxu0 0.0
    %686 = vmatpush1.xpose.msra.mxu0 0.0
    %687 = vmatprep.subr.mxu0 0.0
    %688 = vmatpush1.xpose.msra.mxu0 0.0
    %689 = vmatprep.subr.mxu0 0.0
    %690 = vmatpush1.xpose.msra.mxu0 0.0
    %691 = vmatprep.subr.mxu0 0.0
    %692 = vmatpush1.xpose.msra.mxu0 0.0
    %693 = vmatprep.subr.mxu0 0.0
    %694 = vmatpush1.xpose.msra.mxu0 0.0
    %695 = vmatprep.subr.mxu0 0.0
    %696 = vmatpush1.xpose.msra.mxu0 0.0
    %697 = vmatprep.subr.mxu0 0.0
    %698 = vmatpush1.xpose.msra.mxu0 0.0
    %699 = vmatprep.subr.mxu0 0.0
    %700 = vmatpush1.xpose.msra.mxu0 0.0
    %701 = vmatprep.subr.mxu0 0.0
    %702 = vmatpush1.xpose.msra.mxu0 0.0
    %703 = vmatprep.mubr.f32.mxu0 0.0
    %704 = vmatmul.mubr.f32.gmra.mrb[0].mxu0 %v621
    %v705 = vpop.f32.mrb[0].mxu0
    %v706 = vadd.f32 0.0, %v705
    %v707 = vpop.f32.mrb[0].mxu0
    %708 = vdwg.mxu0
    %717 = vrot.lane.b32.xlu0 %v347, 96
    %v718 = vpop.permute.xlu0 %717
    %719 = vrot.lane.b32.xlu0 %v348, 96
    %v720 = vpop.permute.xlu0 %719
    %721 = vrot.lane.b32.xlu0 %v349, 96
    %v722 = vpop.permute.xlu0 %721
    %723 = vrot.lane.b32.xlu0 %v350, 96
    %v724 = vpop.permute.xlu0 %723
    %725 = vrot.lane.b32.xlu0 %v351, 96
    %v726 = vpop.permute.xlu0 %725
    %727 = vrot.lane.b32.xlu0 %v352, 96
    %v728 = vpop.permute.xlu0 %727
    %729 = vrot.lane.b32.xlu0 %v353, 96
    %v730 = vpop.permute.xlu0 %729
    %731 = vrot.lane.b32.xlu0 %v354, 96
    %v732 = vpop.permute.xlu0 %731
    %v734 = vsel %vm161, %v263, 0
    %v736 = vsel %vm161, %v718, 0
    %v738 = vsel %vm161, %v720, 0
    %v740 = vsel %vm161, %v722, 0
    %v742 = vsel %vm161, %v724, 0
    %v744 = vsel %vm161, %v726, 0
    %v746 = vsel %vm161, %v728, 0
    %v748 = vsel %vm161, %v730, 0
    %v750 = vsel %vm161, %v732, 0
    %752 = vmatprep.subr.mxu0 0.0
    %753 = vmatpush1.xpose.msra.mxu0 %v736
    %754 = vmatprep.subr.mxu0 0.0
    %755 = vmatpush1.xpose.msra.mxu0 %v738
    %756 = vmatprep.subr.mxu0 0.0
    %757 = vmatpush1.xpose.msra.mxu0 %v740
    %758 = vmatprep.subr.mxu0 0.0
    %759 = vmatpush1.xpose.msra.mxu0 %v742
    %760 = vmatprep.subr.mxu0 0.0
    %761 = vmatpush1.xpose.msra.mxu0 %v744
    %762 = vmatprep.subr.mxu0 0.0
    %763 = vmatpush1.xpose.msra.mxu0 %v746
    %764 = vmatprep.subr.mxu0 0.0
    %765 = vmatpush1.xpose.msra.mxu0 %v748
    %766 = vmatprep.subr.mxu0 0.0
    %767 = vmatpush1.xpose.msra.mxu0 %v750
    %768 = vmatprep.subr.mxu0 0.0
    %769 = vmatpush1.xpose.msra.mxu0 0.0
    %770 = vmatprep.subr.mxu0 0.0
    %771 = vmatpush1.xpose.msra.mxu0 0.0
    %772 = vmatprep.subr.mxu0 0.0
    %773 = vmatpush1.xpose.msra.mxu0 0.0
    %774 = vmatprep.subr.mxu0 0.0
    %775 = vmatpush1.xpose.msra.mxu0 0.0
    %776 = vmatprep.subr.mxu0 0.0
    %777 = vmatpush1.xpose.msra.mxu0 0.0
    %778 = vmatprep.subr.mxu0 0.0
    %779 = vmatpush1.xpose.msra.mxu0 0.0
    %780 = vmatprep.subr.mxu0 0.0
    %781 = vmatpush1.xpose.msra.mxu0 0.0
    %782 = vmatprep.subr.mxu0 0.0
    %783 = vmatpush1.xpose.msra.mxu0 0.0
    %784 = vmatprep.subr.mxu0 0.0
    %785 = vmatpush1.xpose.msra.mxu0 0.0
    %786 = vmatprep.subr.mxu0 0.0
    %787 = vmatpush1.xpose.msra.mxu0 0.0
    %788 = vmatprep.subr.mxu0 0.0
    %789 = vmatpush1.xpose.msra.mxu0 0.0
    %790 = vmatprep.subr.mxu0 0.0
    %791 = vmatpush1.xpose.msra.mxu0 0.0
    %792 = vmatprep.subr.mxu0 0.0
    %793 = vmatpush1.xpose.msra.mxu0 0.0
    %794 = vmatprep.subr.mxu0 0.0
    %795 = vmatpush1.xpose.msra.mxu0 0.0
    %796 = vmatprep.subr.mxu0 0.0
    %797 = vmatpush1.xpose.msra.mxu0 0.0
    %798 = vmatprep.subr.mxu0 0.0
    %799 = vmatpush1.xpose.msra.mxu0 0.0
    %800 = vmatprep.subr.mxu0 0.0
    %801 = vmatpush1.xpose.msra.mxu0 0.0
    %802 = vmatprep.subr.mxu0 0.0
    %803 = vmatpush1.xpose.msra.mxu0 0.0
    %804 = vmatprep.subr.mxu0 0.0
    %805 = vmatpush1.xpose.msra.mxu0 0.0
    %806 = vmatprep.subr.mxu0 0.0
    %807 = vmatpush1.xpose.msra.mxu0 0.0
    %808 = vmatprep.subr.mxu0 0.0
    %809 = vmatpush1.xpose.msra.mxu0 0.0
    %810 = vmatprep.subr.mxu0 0.0
    %811 = vmatpush1.xpose.msra.mxu0 0.0
    %812 = vmatprep.subr.mxu0 0.0
    %813 = vmatpush1.xpose.msra.mxu0 0.0
    %814 = vmatprep.subr.mxu0 0.0
    %815 = vmatpush1.xpose.msra.mxu0 0.0
    %816 = vmatprep.mubr.f32.mxu0 0.0
    %817 = vmatmul.mubr.f32.gmra.mrb[0].mxu0 %v734
    %v818 = vpop.f32.mrb[0].mxu0
    %v819 = vadd.f32 0.0, %v818
    %v820 = vpop.f32.mrb[0].mxu0
    %821 = vdwg.mxu0
    %830 = vrot.lane.b32.xlu0 %v355, 96
    %v831 = vpop.permute.xlu0 %830
    %832 = vrot.lane.b32.xlu0 %v356, 96
    %v833 = vpop.permute.xlu0 %832
    %834 = vrot.lane.b32.xlu0 %v357, 96
    %v835 = vpop.permute.xlu0 %834
    %836 = vrot.lane.b32.xlu0 %v358, 96
    %v837 = vpop.permute.xlu0 %836
    %838 = vrot.lane.b32.xlu0 %v359, 96
    %v839 = vpop.permute.xlu0 %838
    %840 = vrot.lane.b32.xlu0 %v360, 96
    %v841 = vpop.permute.xlu0 %840
    %842 = vrot.lane.b32.xlu0 %v361, 96
    %v843 = vpop.permute.xlu0 %842
    %844 = vrot.lane.b32.xlu0 %v362, 96
    %v845 = vpop.permute.xlu0 %844
    %v847 = vsel %vm161, %v268, 0
    %v849 = vsel %vm161, %v831, 0
    %v851 = vsel %vm161, %v833, 0
    %v853 = vsel %vm161, %v835, 0
    %v855 = vsel %vm161, %v837, 0
    %v857 = vsel %vm161, %v839, 0
    %v859 = vsel %vm161, %v841, 0
    %v861 = vsel %vm161, %v843, 0
    %v863 = vsel %vm161, %v845, 0
    %865 = vmatprep.subr.mxu0 0.0
    %866 = vmatpush1.xpose.msra.mxu0 %v849
    %867 = vmatprep.subr.mxu0 0.0
    %868 = vmatpush1.xpose.msra.mxu0 %v851
    %869 = vmatprep.subr.mxu0 0.0
    %870 = vmatpush1.xpose.msra.mxu0 %v853
    %871 = vmatprep.subr.mxu0 0.0
    %872 = vmatpush1.xpose.msra.mxu0 %v855
    %873 = vmatprep.subr.mxu0 0.0
    %874 = vmatpush1.xpose.msra.mxu0 %v857
    %875 = vmatprep.subr.mxu0 0.0
    %876 = vmatpush1.xpose.msra.mxu0 %v859
    %877 = vmatprep.subr.mxu0 0.0
    %878 = vmatpush1.xpose.msra.mxu0 %v861
    %879 = vmatprep.subr.mxu0 0.0
    %880 = vmatpush1.xpose.msra.mxu0 %v863
    %881 = vmatprep.subr.mxu0 0.0
    %882 = vmatpush1.xpose.msra.mxu0 0.0
    %883 = vmatprep.subr.mxu0 0.0
    %884 = vmatpush1.xpose.msra.mxu0 0.0
    %885 = vmatprep.subr.mxu0 0.0
    %886 = vmatpush1.xpose.msra.mxu0 0.0
    %887 = vmatprep.subr.mxu0 0.0
    %888 = vmatpush1.xpose.msra.mxu0 0.0
    %889 = vmatprep.subr.mxu0 0.0
    %890 = vmatpush1.xpose.msra.mxu0 0.0
    %891 = vmatprep.subr.mxu0 0.0
    %892 = vmatpush1.xpose.msra.mxu0 0.0
    %893 = vmatprep.subr.mxu0 0.0
    %894 = vmatpush1.xpose.msra.mxu0 0.0
    %895 = vmatprep.subr.mxu0 0.0
    %896 = vmatpush1.xpose.msra.mxu0 0.0
    %897 = vmatprep.subr.mxu0 0.0
    %898 = vmatpush1.xpose.msra.mxu0 0.0
    %899 = vmatprep.subr.mxu0 0.0
    %900 = vmatpush1.xpose.msra.mxu0 0.0
    %901 = vmatprep.subr.mxu0 0.0
    %902 = vmatpush1.xpose.msra.mxu0 0.0
    %903 = vmatprep.subr.mxu0 0.0
    %904 = vmatpush1.xpose.msra.mxu0 0.0
    %905 = vmatprep.subr.mxu0 0.0
    %906 = vmatpush1.xpose.msra.mxu0 0.0
    %907 = vmatprep.subr.mxu0 0.0
    %908 = vmatpush1.xpose.msra.mxu0 0.0
    %909 = vmatprep.subr.mxu0 0.0
    %910 = vmatpush1.xpose.msra.mxu0 0.0
    %911 = vmatprep.subr.mxu0 0.0
    %912 = vmatpush1.xpose.msra.mxu0 0.0
    %913 = vmatprep.subr.mxu0 0.0
    %914 = vmatpush1.xpose.msra.mxu0 0.0
    %915 = vmatprep.subr.mxu0 0.0
    %916 = vmatpush1.xpose.msra.mxu0 0.0
    %917 = vmatprep.subr.mxu0 0.0
    %918 = vmatpush1.xpose.msra.mxu0 0.0
    %919 = vmatprep.subr.mxu0 0.0
    %920 = vmatpush1.xpose.msra.mxu0 0.0
    %921 = vmatprep.subr.mxu0 0.0
    %922 = vmatpush1.xpose.msra.mxu0 0.0
    %923 = vmatprep.subr.mxu0 0.0
    %924 = vmatpush1.xpose.msra.mxu0 0.0
    %925 = vmatprep.subr.mxu0 0.0
    %926 = vmatpush1.xpose.msra.mxu0 0.0
    %927 = vmatprep.subr.mxu0 0.0
    %928 = vmatpush1.xpose.msra.mxu0 0.0
    %929 = vmatprep.mubr.f32.mxu0 0.0
    %930 = vmatmul.mubr.f32.gmra.mrb[0].mxu0 %v847
    %v931 = vpop.f32.mrb[0].mxu0
    %v932 = vadd.f32 0.0, %v931
    %v933 = vpop.f32.mrb[0].mxu0
    %934 = vdwg.mxu0
    %943 = vrot.lane.b32.xlu0 %v363, 96
    %v944 = vpop.permute.xlu0 %943
    %945 = vrot.lane.b32.xlu0 %v364, 96
    %v946 = vpop.permute.xlu0 %945
    %947 = vrot.lane.b32.xlu0 %v365, 96
    %v948 = vpop.permute.xlu0 %947
    %949 = vrot.lane.b32.xlu0 %v366, 96
    %v950 = vpop.permute.xlu0 %949
    %951 = vrot.lane.b32.xlu0 %v367, 96
    %v952 = vpop.permute.xlu0 %951
    %953 = vrot.lane.b32.xlu0 %v368, 96
    %v954 = vpop.permute.xlu0 %953
    %955 = vrot.lane.b32.xlu0 %v369, 96
    %v956 = vpop.permute.xlu0 %955
    %957 = vrot.lane.b32.xlu0 %v370, 96
    %v958 = vpop.permute.xlu0 %957
    %v960 = vsel %vm161, %v273, 0
    %v962 = vsel %vm161, %v944, 0
    %v964 = vsel %vm161, %v946, 0
    %v966 = vsel %vm161, %v948, 0
    %v968 = vsel %vm161, %v950, 0
    %v970 = vsel %vm161, %v952, 0
    %v972 = vsel %vm161, %v954, 0
    %v974 = vsel %vm161, %v956, 0
    %v976 = vsel %vm161, %v958, 0
    %978 = vmatprep.subr.mxu0 0.0
    %979 = vmatpush1.xpose.msra.mxu0 %v962
    %980 = vmatprep.subr.mxu0 0.0
    %981 = vmatpush1.xpose.msra.mxu0 %v964
    %982 = vmatprep.subr.mxu0 0.0
    %983 = vmatpush1.xpose.msra.mxu0 %v966
    %984 = vmatprep.subr.mxu0 0.0
    %985 = vmatpush1.xpose.msra.mxu0 %v968
    %986 = vmatprep.subr.mxu0 0.0
    %987 = vmatpush1.xpose.msra.mxu0 %v970
    %988 = vmatprep.subr.mxu0 0.0
    %989 = vmatpush1.xpose.msra.mxu0 %v972
    %990 = vmatprep.subr.mxu0 0.0
    %991 = vmatpush1.xpose.msra.mxu0 %v974
    %992 = vmatprep.subr.mxu0 0.0
    %993 = vmatpush1.xpose.msra.mxu0 %v976
    %994 = vmatprep.subr.mxu0 0.0
    %995 = vmatpush1.xpose.msra.mxu0 0.0
    %996 = vmatprep.subr.mxu0 0.0
    %997 = vmatpush1.xpose.msra.mxu0 0.0
    %998 = vmatprep.subr.mxu0 0.0
    %999 = vmatpush1.xpose.msra.mxu0 0.0
    %1000 = vmatprep.subr.mxu0 0.0
    %1001 = vmatpush1.xpose.msra.mxu0 0.0
    %1002 = vmatprep.subr.mxu0 0.0
    %1003 = vmatpush1.xpose.msra.mxu0 0.0
    %1004 = vmatprep.subr.mxu0 0.0
    %1005 = vmatpush1.xpose.msra.mxu0 0.0
    %1006 = vmatprep.subr.mxu0 0.0
    %1007 = vmatpush1.xpose.msra.mxu0 0.0
    %1008 = vmatprep.subr.mxu0 0.0
    %1009 = vmatpush1.xpose.msra.mxu0 0.0
    %1010 = vmatprep.subr.mxu0 0.0
    %1011 = vmatpush1.xpose.msra.mxu0 0.0
    %1012 = vmatprep.subr.mxu0 0.0
    %1013 = vmatpush1.xpose.msra.mxu0 0.0
    %1014 = vmatprep.subr.mxu0 0.0
    %1015 = vmatpush1.xpose.msra.mxu0 0.0
    %1016 = vmatprep.subr.mxu0 0.0
    %1017 = vmatpush1.xpose.msra.mxu0 0.0
    %1018 = vmatprep.subr.mxu0 0.0
    %1019 = vmatpush1.xpose.msra.mxu0 0.0
    %1020 = vmatprep.subr.mxu0 0.0
    %1021 = vmatpush1.xpose.msra.mxu0 0.0
    %1022 = vmatprep.subr.mxu0 0.0
    %1023 = vmatpush1.xpose.msra.mxu0 0.0
    %1024 = vmatprep.subr.mxu0 0.0
    %1025 = vmatpush1.xpose.msra.mxu0 0.0
    %1026 = vmatprep.subr.mxu0 0.0
    %1027 = vmatpush1.xpose.msra.mxu0 0.0
    %1028 = vmatprep.subr.mxu0 0.0
    %1029 = vmatpush1.xpose.msra.mxu0 0.0
    %1030 = vmatprep.subr.mxu0 0.0
    %1031 = vmatpush1.xpose.msra.mxu0 0.0
    %1032 = vmatprep.subr.mxu0 0.0
    %1033 = vmatpush1.xpose.msra.mxu0 0.0
    %1034 = vmatprep.subr.mxu0 0.0
    %1035 = vmatpush1.xpose.msra.mxu0 0.0
    %1036 = vmatprep.subr.mxu0 0.0
    %1037 = vmatpush1.xpose.msra.mxu0 0.0
    %1038 = vmatprep.subr.mxu0 0.0
    %1039 = vmatpush1.xpose.msra.mxu0 0.0
    %1040 = vmatprep.subr.mxu0 0.0
    %1041 = vmatpush1.xpose.msra.mxu0 0.0
    %1042 = vmatprep.mubr.f32.mxu0 0.0
    %1043 = vmatmul.mubr.f32.gmra.mrb[0].mxu0 %v960
    %v1044 = vpop.f32.mrb[0].mxu0
    %v1045 = vadd.f32 0.0, %v1044
    %v1046 = vpop.f32.mrb[0].mxu0
    %1047 = vdwg.mxu0
    %1056 = vrot.lane.b32.xlu0 %v371, 96
    %v1057 = vpop.permute.xlu0 %1056
    %1058 = vrot.lane.b32.xlu0 %v372, 96
    %v1059 = vpop.permute.xlu0 %1058
    %1060 = vrot.lane.b32.xlu0 %v373, 96
    %v1061 = vpop.permute.xlu0 %1060
    %1062 = vrot.lane.b32.xlu0 %v374, 96
    %v1063 = vpop.permute.xlu0 %1062
    %1064 = vrot.lane.b32.xlu0 %v375, 96
    %v1065 = vpop.permute.xlu0 %1064
    %1066 = vrot.lane.b32.xlu0 %v376, 96
    %v1067 = vpop.permute.xlu0 %1066
    %1068 = vrot.lane.b32.xlu0 %v377, 96
    %v1069 = vpop.permute.xlu0 %1068
    %1070 = vrot.lane.b32.xlu0 %v378, 96
    %v1071 = vpop.permute.xlu0 %1070
    %v1073 = vsel %vm161, %v278, 0
    %v1075 = vsel %vm161, %v1057, 0
    %v1077 = vsel %vm161, %v1059, 0
    %v1079 = vsel %vm161, %v1061, 0
    %v1081 = vsel %vm161, %v1063, 0
    %v1083 = vsel %vm161, %v1065, 0
    %v1085 = vsel %vm161, %v1067, 0
    %v1087 = vsel %vm161, %v1069, 0
    %v1089 = vsel %vm161, %v1071, 0
    %1091 = vmatprep.subr.mxu0 0.0
    %1092 = vmatpush1.xpose.msra.mxu0 %v1075
    %1093 = vmatprep.subr.mxu0 0.0
    %1094 = vmatpush1.xpose.msra.mxu0 %v1077
    %1095 = vmatprep.subr.mxu0 0.0
    %1096 = vmatpush1.xpose.msra.mxu0 %v1079
    %1097 = vmatprep.subr.mxu0 0.0
    %1098 = vmatpush1.xpose.msra.mxu0 %v1081
    %1099 = vmatprep.subr.mxu0 0.0
    %1100 = vmatpush1.xpose.msra.mxu0 %v1083
    %1101 = vmatprep.subr.mxu0 0.0
    %1102 = vmatpush1.xpose.msra.mxu0 %v1085
    %1103 = vmatprep.subr.mxu0 0.0
    %1104 = vmatpush1.xpose.msra.mxu0 %v1087
    %1105 = vmatprep.subr.mxu0 0.0
    %1106 = vmatpush1.xpose.msra.mxu0 %v1089
    %1107 = vmatprep.subr.mxu0 0.0
    %1108 = vmatpush1.xpose.msra.mxu0 0.0
    %1109 = vmatprep.subr.mxu0 0.0
    %1110 = vmatpush1.xpose.msra.mxu0 0.0
    %1111 = vmatprep.subr.mxu0 0.0
    %1112 = vmatpush1.xpose.msra.mxu0 0.0
    %1113 = vmatprep.subr.mxu0 0.0
    %1114 = vmatpush1.xpose.msra.mxu0 0.0
    %1115 = vmatprep.subr.mxu0 0.0
    %1116 = vmatpush1.xpose.msra.mxu0 0.0
    %1117 = vmatprep.subr.mxu0 0.0
    %1118 = vmatpush1.xpose.msra.mxu0 0.0
    %1119 = vmatprep.subr.mxu0 0.0
    %1120 = vmatpush1.xpose.msra.mxu0 0.0
    %1121 = vmatprep.subr.mxu0 0.0
    %1122 = vmatpush1.xpose.msra.mxu0 0.0
    %1123 = vmatprep.subr.mxu0 0.0
    %1124 = vmatpush1.xpose.msra.mxu0 0.0
    %1125 = vmatprep.subr.mxu0 0.0
    %1126 = vmatpush1.xpose.msra.mxu0 0.0
    %1127 = vmatprep.subr.mxu0 0.0
    %1128 = vmatpush1.xpose.msra.mxu0 0.0
    %1129 = vmatprep.subr.mxu0 0.0
    %1130 = vmatpush1.xpose.msra.mxu0 0.0
    %1131 = vmatprep.subr.mxu0 0.0
    %1132 = vmatpush1.xpose.msra.mxu0 0.0
    %1133 = vmatprep.subr.mxu0 0.0
    %1134 = vmatpush1.xpose.msra.mxu0 0.0
    %1135 = vmatprep.subr.mxu0 0.0
    %1136 = vmatpush1.xpose.msra.mxu0 0.0
    %1137 = vmatprep.subr.mxu0 0.0
    %1138 = vmatpush1.xpose.msra.mxu0 0.0
    %1139 = vmatprep.subr.mxu0 0.0
    %1140 = vmatpush1.xpose.msra.mxu0 0.0
    %1141 = vmatprep.subr.mxu0 0.0
    %1142 = vmatpush1.xpose.msra.mxu0 0.0
    %1143 = vmatprep.subr.mxu0 0.0
    %1144 = vmatpush1.xpose.msra.mxu0 0.0
    %1145 = vmatprep.subr.mxu0 0.0
    %1146 = vmatpush1.xpose.msra.mxu0 0.0
    %1147 = vmatprep.subr.mxu0 0.0
    %1148 = vmatpush1.xpose.msra.mxu0 0.0
    %1149 = vmatprep.subr.mxu0 0.0
    %1150 = vmatpush1.xpose.msra.mxu0 0.0
    %1151 = vmatprep.subr.mxu0 0.0
    %1152 = vmatpush1.xpose.msra.mxu0 0.0
    %1153 = vmatprep.subr.mxu0 0.0
    %1154 = vmatpush1.xpose.msra.mxu0 0.0
    %1155 = vmatprep.mubr.f32.mxu0 0.0
    %1156 = vmatmul.mubr.f32.gmra.mrb[0].mxu0 %v1073
    %v1157 = vpop.f32.mrb[0].mxu0
    %v1158 = vadd.f32 0.0, %v1157
    %v1159 = vpop.f32.mrb[0].mxu0
    %1160 = vdwg.mxu0
    %1169 = vrot.lane.b32.xlu0 %v379, 96
    %v1170 = vpop.permute.xlu0 %1169
    %1171 = vrot.lane.b32.xlu0 %v380, 96
    %v1172 = vpop.permute.xlu0 %1171
    %1173 = vrot.lane.b32.xlu0 %v381, 96
    %v1174 = vpop.permute.xlu0 %1173
    %1175 = vrot.lane.b32.xlu0 %v382, 96
    %v1176 = vpop.permute.xlu0 %1175
    %1177 = vrot.lane.b32.xlu0 %v383, 96
    %v1178 = vpop.permute.xlu0 %1177
    %1179 = vrot.lane.b32.xlu0 %v384, 96
    %v1180 = vpop.permute.xlu0 %1179
    %1181 = vrot.lane.b32.xlu0 %v385, 96
    %v1182 = vpop.permute.xlu0 %1181
    %1183 = vrot.lane.b32.xlu0 %v386, 96
    %v1184 = vpop.permute.xlu0 %1183
    %v1186 = vsel %vm161, %v283, 0
    %v1188 = vsel %vm161, %v1170, 0
    %v1190 = vsel %vm161, %v1172, 0
    %v1192 = vsel %vm161, %v1174, 0
    %v1194 = vsel %vm161, %v1176, 0
    %v1196 = vsel %vm161, %v1178, 0
    %v1198 = vsel %vm161, %v1180, 0
    %v1200 = vsel %vm161, %v1182, 0
    %v1202 = vsel %vm161, %v1184, 0
    %1204 = vmatprep.subr.mxu0 0.0
    %1205 = vmatpush1.xpose.msra.mxu0 %v1188
    %1206 = vmatprep.subr.mxu0 0.0
    %1207 = vmatpush1.xpose.msra.mxu0 %v1190
    %1208 = vmatprep.subr.mxu0 0.0
    %1209 = vmatpush1.xpose.msra.mxu0 %v1192
    %1210 = vmatprep.subr.mxu0 0.0
    %1211 = vmatpush1.xpose.msra.mxu0 %v1194
    %1212 = vmatprep.subr.mxu0 0.0
    %1213 = vmatpush1.xpose.msra.mxu0 %v1196
    %1214 = vmatprep.subr.mxu0 0.0
    %1215 = vmatpush1.xpose.msra.mxu0 %v1198
    %1216 = vmatprep.subr.mxu0 0.0
    %1217 = vmatpush1.xpose.msra.mxu0 %v1200
    %1218 = vmatprep.subr.mxu0 0.0
    %1219 = vmatpush1.xpose.msra.mxu0 %v1202
    %1220 = vmatprep.subr.mxu0 0.0
    %1221 = vmatpush1.xpose.msra.mxu0 0.0
    %1222 = vmatprep.subr.mxu0 0.0
    %1223 = vmatpush1.xpose.msra.mxu0 0.0
    %1224 = vmatprep.subr.mxu0 0.0
    %1225 = vmatpush1.xpose.msra.mxu0 0.0
    %1226 = vmatprep.subr.mxu0 0.0
    %1227 = vmatpush1.xpose.msra.mxu0 0.0
    %1228 = vmatprep.subr.mxu0 0.0
    %1229 = vmatpush1.xpose.msra.mxu0 0.0
    %1230 = vmatprep.subr.mxu0 0.0
    %1231 = vmatpush1.xpose.msra.mxu0 0.0
    %1232 = vmatprep.subr.mxu0 0.0
    %1233 = vmatpush1.xpose.msra.mxu0 0.0
    %1234 = vmatprep.subr.mxu0 0.0
    %1235 = vmatpush1.xpose.msra.mxu0 0.0
    %1236 = vmatprep.subr.mxu0 0.0
    %1237 = vmatpush1.xpose.msra.mxu0 0.0
    %1238 = vmatprep.subr.mxu0 0.0
    %1239 = vmatpush1.xpose.msra.mxu0 0.0
    %1240 = vmatprep.subr.mxu0 0.0
    %1241 = vmatpush1.xpose.msra.mxu0 0.0
    %1242 = vmatprep.subr.mxu0 0.0
    %1243 = vmatpush1.xpose.msra.mxu0 0.0
    %1244 = vmatprep.subr.mxu0 0.0
    %1245 = vmatpush1.xpose.msra.mxu0 0.0
    %1246 = vmatprep.subr.mxu0 0.0
    %1247 = vmatpush1.xpose.msra.mxu0 0.0
    %1248 = vmatprep.subr.mxu0 0.0
    %1249 = vmatpush1.xpose.msra.mxu0 0.0
    %1250 = vmatprep.subr.mxu0 0.0
    %1251 = vmatpush1.xpose.msra.mxu0 0.0
    %1252 = vmatprep.subr.mxu0 0.0
    %1253 = vmatpush1.xpose.msra.mxu0 0.0
    %1254 = vmatprep.subr.mxu0 0.0
    %1255 = vmatpush1.xpose.msra.mxu0 0.0
    %1256 = vmatprep.subr.mxu0 0.0
    %1257 = vmatpush1.xpose.msra.mxu0 0.0
    %1258 = vmatprep.subr.mxu0 0.0
    %1259 = vmatpush1.xpose.msra.mxu0 0.0
    %1260 = vmatprep.subr.mxu0 0.0
    %1261 = vmatpush1.xpose.msra.mxu0 0.0
    %1262 = vmatprep.subr.mxu0 0.0
    %1263 = vmatpush1.xpose.msra.mxu0 0.0
    %1264 = vmatprep.subr.mxu0 0.0
    %1265 = vmatpush1.xpose.msra.mxu0 0.0
    %1266 = vmatprep.subr.mxu0 0.0
    %1267 = vmatpush1.xpose.msra.mxu0 0.0
    %1268 = vmatprep.mubr.f32.mxu0 0.0
    %1269 = vmatmul.mubr.f32.gmra.mrb[0].mxu0 %v1186
    %v1270 = vpop.f32.mrb[0].mxu0
    %v1271 = vadd.f32 0.0, %v1270
    %v1272 = vpop.f32.mrb[0].mxu0
    %1273 = vdwg.mxu0
    %1282 = vrot.lane.b32.xlu0 %v387, 96
    %v1283 = vpop.permute.xlu0 %1282
    %1284 = vrot.lane.b32.xlu0 %v388, 96
    %v1285 = vpop.permute.xlu0 %1284
    %1286 = vrot.lane.b32.xlu0 %v389, 96
    %v1287 = vpop.permute.xlu0 %1286
    %1288 = vrot.lane.b32.xlu0 %v390, 96
    %v1289 = vpop.permute.xlu0 %1288
    %1290 = vrot.lane.b32.xlu0 %v391, 96
    %v1291 = vpop.permute.xlu0 %1290
    %1292 = vrot.lane.b32.xlu0 %v392, 96
    %v1293 = vpop.permute.xlu0 %1292
    %1294 = vrot.lane.b32.xlu0 %v393, 96
    %v1295 = vpop.permute.xlu0 %1294
    %1296 = vrot.lane.b32.xlu0 %v394, 96
    %v1297 = vpop.permute.xlu0 %1296
    %v1299 = vsel %vm161, %v288, 0
    %v1301 = vsel %vm161, %v1283, 0
    %v1303 = vsel %vm161, %v1285, 0
    %v1305 = vsel %vm161, %v1287, 0
    %v1307 = vsel %vm161, %v1289, 0
    %v1309 = vsel %vm161, %v1291, 0
    %v1311 = vsel %vm161, %v1293, 0
    %v1313 = vsel %vm161, %v1295, 0
    %v1315 = vsel %vm161, %v1297, 0
    %1317 = vmatprep.subr.mxu0 0.0
    %1318 = vmatpush1.xpose.msra.mxu0 %v1301
    %1319 = vmatprep.subr.mxu0 0.0
    %1320 = vmatpush1.xpose.msra.mxu0 %v1303
    %1321 = vmatprep.subr.mxu0 0.0
    %1322 = vmatpush1.xpose.msra.mxu0 %v1305
    %1323 = vmatprep.subr.mxu0 0.0
    %1324 = vmatpush1.xpose.msra.mxu0 %v1307
    %1325 = vmatprep.subr.mxu0 0.0
    %1326 = vmatpush1.xpose.msra.mxu0 %v1309
    %1327 = vmatprep.subr.mxu0 0.0
    %1328 = vmatpush1.xpose.msra.mxu0 %v1311
    %1329 = vmatprep.subr.mxu0 0.0
    %1330 = vmatpush1.xpose.msra.mxu0 %v1313
    %1331 = vmatprep.subr.mxu0 0.0
    %1332 = vmatpush1.xpose.msra.mxu0 %v1315
    %1333 = vmatprep.subr.mxu0 0.0
    %1334 = vmatpush1.xpose.msra.mxu0 0.0
    %1335 = vmatprep.subr.mxu0 0.0
    %1336 = vmatpush1.xpose.msra.mxu0 0.0
    %1337 = vmatprep.subr.mxu0 0.0
    %1338 = vmatpush1.xpose.msra.mxu0 0.0
    %1339 = vmatprep.subr.mxu0 0.0
    %1340 = vmatpush1.xpose.msra.mxu0 0.0
    %1341 = vmatprep.subr.mxu0 0.0
    %1342 = vmatpush1.xpose.msra.mxu0 0.0
    %1343 = vmatprep.subr.mxu0 0.0
    %1344 = vmatpush1.xpose.msra.mxu0 0.0
    %1345 = vmatprep.subr.mxu0 0.0
    %1346 = vmatpush1.xpose.msra.mxu0 0.0
    %1347 = vmatprep.subr.mxu0 0.0
    %1348 = vmatpush1.xpose.msra.mxu0 0.0
    %1349 = vmatprep.subr.mxu0 0.0
    %1350 = vmatpush1.xpose.msra.mxu0 0.0
    %1351 = vmatprep.subr.mxu0 0.0
    %1352 = vmatpush1.xpose.msra.mxu0 0.0
    %1353 = vmatprep.subr.mxu0 0.0
    %1354 = vmatpush1.xpose.msra.mxu0 0.0
    %1355 = vmatprep.subr.mxu0 0.0
    %1356 = vmatpush1.xpose.msra.mxu0 0.0
    %1357 = vmatprep.subr.mxu0 0.0
    %1358 = vmatpush1.xpose.msra.mxu0 0.0
    %1359 = vmatprep.subr.mxu0 0.0
    %1360 = vmatpush1.xpose.msra.mxu0 0.0
    %1361 = vmatprep.subr.mxu0 0.0
    %1362 = vmatpush1.xpose.msra.mxu0 0.0
    %1363 = vmatprep.subr.mxu0 0.0
    %1364 = vmatpush1.xpose.msra.mxu0 0.0
    %1365 = vmatprep.subr.mxu0 0.0
    %1366 = vmatpush1.xpose.msra.mxu0 0.0
    %1367 = vmatprep.subr.mxu0 0.0
    %1368 = vmatpush1.xpose.msra.mxu0 0.0
    %1369 = vmatprep.subr.mxu0 0.0
    %1370 = vmatpush1.xpose.msra.mxu0 0.0
    %1371 = vmatprep.subr.mxu0 0.0
    %1372 = vmatpush1.xpose.msra.mxu0 0.0
    %1373 = vmatprep.subr.mxu0 0.0
    %1374 = vmatpush1.xpose.msra.mxu0 0.0
    %1375 = vmatprep.subr.mxu0 0.0
    %1376 = vmatpush1.xpose.msra.mxu0 0.0
    %1377 = vmatprep.subr.mxu0 0.0
    %1378 = vmatpush1.xpose.msra.mxu0 0.0
    %1379 = vmatprep.subr.mxu0 0.0
    %1380 = vmatpush1.xpose.msra.mxu0 0.0
    %1381 = vmatprep.mubr.f32.mxu0 0.0
    %1382 = vmatmul.mubr.f32.gmra.mrb[0].mxu0 %v1299
    %v1383 = vpop.f32.mrb[0].mxu0
    %v1384 = vadd.f32 0.0, %v1383
    %v1385 = vpop.f32.mrb[0].mxu0
    %1386 = vdwg.mxu0
    %vm1387 = vcmask 523264
    %v1388 = vsel %vm1387, %v593, -inf
    %1389 = vmax.xlane.f32.xlu0 %v1388
    %v1390 = vpop.xlane.xlu0 %1389
    %v1391 = vsel %vm1387, %v706, -inf
    %1392 = vmax.xlane.f32.xlu0 %v1391
    %v1393 = vpop.xlane.xlu0 %1392
    %v1394 = vsel %vm1387, %v819, -inf
    %1395 = vmax.xlane.f32.xlu0 %v1394
    %v1396 = vpop.xlane.xlu0 %1395
    %v1397 = vsel %vm1387, %v932, -inf
    %1398 = vmax.xlane.f32.xlu0 %v1397
    %v1399 = vpop.xlane.xlu0 %1398
    %v1400 = vsel %vm1387, %v1045, -inf
    %1401 = vmax.xlane.f32.xlu0 %v1400
    %v1402 = vpop.xlane.xlu0 %1401
    %v1403 = vsel %vm1387, %v1158, -inf
    %1404 = vmax.xlane.f32.xlu0 %v1403
    %v1405 = vpop.xlane.xlu0 %1404
    %v1406 = vsel %vm1387, %v1271, -inf
    %1407 = vmax.xlane.f32.xlu0 %v1406
    %v1408 = vpop.xlane.xlu0 %1407
    %v1409 = vsel %vm1387, %v1384, -inf
    %1410 = vmax.xlane.f32.xlu0 %v1409
    %v1411 = vpop.xlane.xlu0 %1410
    %v1412 = vsub.f32 %v593, %v1390
    %v1413 = vsub.f32 %v706, %v1393
    %v1414 = vsub.f32 %v819, %v1396
    %v1415 = vsub.f32 %v932, %v1399
    %v1416 = vsub.f32 %v1045, %v1402
    %v1417 = vsub.f32 %v1158, %v1405
    %v1418 = vsub.f32 %v1271, %v1408
    %v1419 = vsub.f32 %v1384, %v1411
    %v1420 = vmul.f32 %v1412, 1.442695
    %v1421 = vpow.pop %v1420
    %v1422 = vmul.f32 %v1413, 1.442695
    %v1423 = vpow.pop %v1422
    %v1424 = vmul.f32 %v1414, 1.442695
    %v1425 = vpow.pop %v1424
    %v1426 = vmul.f32 %v1415, 1.442695
    %v1427 = vpow.pop %v1426
    %v1428 = vmul.f32 %v1416, 1.442695
    %v1429 = vpow.pop %v1428
    %v1430 = vmul.f32 %v1417, 1.442695
    %v1431 = vpow.pop %v1430
    %v1432 = vmul.f32 %v1418, 1.442695
    %v1433 = vpow.pop %v1432
    %v1434 = vmul.f32 %v1419, 1.442695
    %v1435 = vpow.pop %v1434
    %v1436 = vld [vmem:[%s9] sm:$0xff]
    %v1437 = vld [vmem:[%s9 + $0x8] sm:$0xff]
    %v1438 = vld [vmem:[%s9 + $0x10] sm:$0xff]
    %v1439 = vld [vmem:[%s9 + $0x18] sm:$0xff]
    %v1440 = vld [vmem:[%s9 + $0x20] sm:$0xff]
    %v1441 = vld [vmem:[%s9 + $0x28] sm:$0xff]
    %v1442 = vld [vmem:[%s9 + $0x30] sm:$0xff]
    %v1443 = vld [vmem:[%s9 + $0x38] sm:$0xff]
    %v1445 = vsel %vm1387, %v1421, 0
    %v1448 = vsel %vm1387, %v1423, 0
    %v1451 = vsel %vm1387, %v1425, 0
    %v1454 = vsel %vm1387, %v1427, 0
    %v1457 = vsel %vm1387, %v1429, 0
    %v1460 = vsel %vm1387, %v1431, 0
    %v1463 = vsel %vm1387, %v1433, 0
    %v1466 = vsel %vm1387, %v1435, 0
    %1468 = vmatprep.subr.mxu0 0.0
    %1469 = vmatpush1.msra.mxu0 %v1436
    %1470 = vmatprep.subr.mxu0 0.0
    %1471 = vmatpush1.msra.mxu0 %v1437
    %1472 = vmatprep.subr.mxu0 0.0
    %1473 = vmatpush1.msra.mxu0 %v1438
    %1474 = vmatprep.subr.mxu0 0.0
    %1475 = vmatpush1.msra.mxu0 %v1439
    %1476 = vmatprep.subr.mxu0 0.0
    %1477 = vmatpush1.msra.mxu0 %v1440
    %1478 = vmatprep.subr.mxu0 0.0
    %1479 = vmatpush1.msra.mxu0 %v1441
    %1480 = vmatprep.subr.mxu0 0.0
    %1481 = vmatpush1.msra.mxu0 %v1442
    %1482 = vmatprep.subr.mxu0 0.0
    %1483 = vmatpush1.msra.mxu0 %v1443
    %1484 = vmatprep.subr.mxu0 0.0
    %1485 = vmatpush1.msra.mxu0 0.0
    %1486 = vmatprep.subr.mxu0 0.0
    %1487 = vmatpush1.msra.mxu0 0.0
    %1488 = vmatprep.subr.mxu0 0.0
    %1489 = vmatpush1.msra.mxu0 0.0
    %1490 = vmatprep.subr.mxu0 0.0
    %1491 = vmatpush1.msra.mxu0 0.0
    %1492 = vmatprep.subr.mxu0 0.0
    %1493 = vmatpush1.msra.mxu0 0.0
    %1494 = vmatprep.subr.mxu0 0.0
    %1495 = vmatpush1.msra.mxu0 0.0
    %1496 = vmatprep.subr.mxu0 0.0
    %1497 = vmatpush1.msra.mxu0 0.0
    %1498 = vmatprep.subr.mxu0 0.0
    %1499 = vmatpush1.msra.mxu0 0.0
    %1500 = vmatprep.subr.mxu0 0.0
    %1501 = vmatpush1.msra.mxu0 0.0
    %1502 = vmatprep.subr.mxu0 0.0
    %1503 = vmatpush1.msra.mxu0 0.0
    %1504 = vmatprep.subr.mxu0 0.0
    %1505 = vmatpush1.msra.mxu0 0.0
    %1506 = vmatprep.subr.mxu0 0.0
    %1507 = vmatpush1.msra.mxu0 0.0
    %1508 = vmatprep.subr.mxu0 0.0
    %1509 = vmatpush1.msra.mxu0 0.0
    %1510 = vmatprep.subr.mxu0 0.0
    %1511 = vmatpush1.msra.mxu0 0.0
    %1512 = vmatprep.subr.mxu0 0.0
    %1513 = vmatpush1.msra.mxu0 0.0
    %1514 = vmatprep.subr.mxu0 0.0
    %1515 = vmatpush1.msra.mxu0 0.0
    %1516 = vmatprep.subr.mxu0 0.0
    %1517 = vmatpush1.msra.mxu0 0.0
    %1518 = vmatprep.subr.mxu0 0.0
    %1519 = vmatpush1.msra.mxu0 0.0
    %1520 = vmatprep.subr.mxu0 0.0
    %1521 = vmatpush1.msra.mxu0 0.0
    %1522 = vmatprep.subr.mxu0 0.0
    %1523 = vmatpush1.msra.mxu0 0.0
    %1524 = vmatprep.subr.mxu0 0.0
    %1525 = vmatpush1.msra.mxu0 0.0
    %1526 = vmatprep.subr.mxu0 0.0
    %1527 = vmatpush1.msra.mxu0 0.0
    %1528 = vmatprep.subr.mxu0 0.0
    %1529 = vmatpush1.msra.mxu0 0.0
    %1530 = vmatprep.subr.mxu0 0.0
    %1531 = vmatpush1.msra.mxu0 0.0
    %1532 = vmatprep.mubr.f32.mxu0 0.0
    %1533 = vmatmul.mubr.f32.gmra.mrb[0].mxu0 %v1445
    %v1534 = vpop.f32.mrb[0].mxu0
    %v1535 = vadd.f32 0.0, %v1534
    %v1536 = vpop.f32.mrb[0].mxu0
    %1537 = vmatprep.mubr.f32.mxu0 0.0
    %1538 = vmatmul.mubr.f32.gmra.mrb[0].mxu0 %v1448
    %v1539 = vpop.f32.mrb[0].mxu0
    %v1540 = vadd.f32 0.0, %v1539
    %v1541 = vpop.f32.mrb[0].mxu0
    %1542 = vmatprep.mubr.f32.mxu0 0.0
    %1543 = vmatmul.mubr.f32.gmra.mrb[0].mxu0 %v1451
    %v1544 = vpop.f32.mrb[0].mxu0
    %v1545 = vadd.f32 0.0, %v1544
    %v1546 = vpop.f32.mrb[0].mxu0
    %1547 = vmatprep.mubr.f32.mxu0 0.0
    %1548 = vmatmul.mubr.f32.gmra.mrb[0].mxu0 %v1454
    %v1549 = vpop.f32.mrb[0].mxu0
    %v1550 = vadd.f32 0.0, %v1549
    %v1551 = vpop.f32.mrb[0].mxu0
    %1552 = vmatprep.mubr.f32.mxu0 0.0
    %1553 = vmatmul.mubr.f32.gmra.mrb[0].mxu0 %v1457
    %v1554 = vpop.f32.mrb[0].mxu0
    %v1555 = vadd.f32 0.0, %v1554
    %v1556 = vpop.f32.mrb[0].mxu0
    %1557 = vmatprep.mubr.f32.mxu0 0.0
    %1558 = vmatmul.mubr.f32.gmra.mrb[0].mxu0 %v1460
    %v1559 = vpop.f32.mrb[0].mxu0
    %v1560 = vadd.f32 0.0, %v1559
    %v1561 = vpop.f32.mrb[0].mxu0
    %1562 = vmatprep.mubr.f32.mxu0 0.0
    %1563 = vmatmul.mubr.f32.gmra.mrb[0].mxu0 %v1463
    %v1564 = vpop.f32.mrb[0].mxu0
    %v1565 = vadd.f32 0.0, %v1564
    %v1566 = vpop.f32.mrb[0].mxu0
    %1567 = vmatprep.mubr.f32.mxu0 0.0
    %1568 = vmatmul.mubr.f32.gmra.mrb[0].mxu0 %v1466
    %v1569 = vpop.f32.mrb[0].mxu0
    %v1570 = vadd.f32 0.0, %v1569
    %v1571 = vpop.f32.mrb[0].mxu0
    %1572 = vdwg.mxu0
    %v1573 = vrcp.pop %v1535
    %v1574 = vrcp.pop %v1540
    %v1575 = vrcp.pop %v1545
    %v1576 = vrcp.pop %v1550
    %v1577 = vrcp.pop %v1555
    %v1578 = vrcp.pop %v1560
    %v1579 = vrcp.pop %v1565
    %v1580 = vrcp.pop %v1570
    %v1581 = vmul.f32 %v1421, %v1573
    %v1582 = vmul.f32 %v1423, %v1574
    %v1583 = vmul.f32 %v1425, %v1575
    %v1584 = vmul.f32 %v1427, %v1576
    %v1585 = vmul.f32 %v1429, %v1577
    %v1586 = vmul.f32 %v1431, %v1578
    %v1587 = vmul.f32 %v1433, %v1579
    %v1588 = vmul.f32 %v1435, %v1580
    %1597 = vrot.lane.b32.xlu0 %v419, 64
    %v1598 = vpop.permute.xlu0 %1597
    %1599 = vrot.lane.b32.xlu0 %v420, 64
    %v1600 = vpop.permute.xlu0 %1599
    %1601 = vrot.lane.b32.xlu0 %v421, 64
    %v1602 = vpop.permute.xlu0 %1601
    %1603 = vrot.lane.b32.xlu0 %v422, 64
    %v1604 = vpop.permute.xlu0 %1603
    %1605 = vrot.lane.b32.xlu0 %v423, 64
    %v1606 = vpop.permute.xlu0 %1605
    %1607 = vrot.lane.b32.xlu0 %v424, 64
    %v1608 = vpop.permute.xlu0 %1607
    %1609 = vrot.lane.b32.xlu0 %v425, 64
    %v1610 = vpop.permute.xlu0 %1609
    %1611 = vrot.lane.b32.xlu0 %v426, 64
    %v1612 = vpop.permute.xlu0 %1611
    %v1622 = vsel %vm1387, %v1581, 0
    %1624 = vmatprep.subr.mxu0 0.0
    %1625 = vmatpush1.msra.mxu0 %v1598
    %1626 = vmatprep.subr.mxu0 0.0
    %1627 = vmatpush1.msra.mxu0 %v1600
    %1628 = vmatprep.subr.mxu0 0.0
    %1629 = vmatpush1.msra.mxu0 %v1602
    %1630 = vmatprep.subr.mxu0 0.0
    %1631 = vmatpush1.msra.mxu0 %v1604
    %1632 = vmatprep.subr.mxu0 0.0
    %1633 = vmatpush1.msra.mxu0 %v1606
    %1634 = vmatprep.subr.mxu0 0.0
    %1635 = vmatpush1.msra.mxu0 %v1608
    %1636 = vmatprep.subr.mxu0 0.0
    %1637 = vmatpush1.msra.mxu0 %v1610
    %1638 = vmatprep.subr.mxu0 0.0
    %1639 = vmatpush1.msra.mxu0 %v1612
    %1640 = vmatprep.subr.mxu0 0.0
    %1641 = vmatpush1.msra.mxu0 0.0
    %1642 = vmatprep.subr.mxu0 0.0
    %1643 = vmatpush1.msra.mxu0 0.0
    %1644 = vmatprep.subr.mxu0 0.0
    %1645 = vmatpush1.msra.mxu0 0.0
    %1646 = vmatprep.subr.mxu0 0.0
    %1647 = vmatpush1.msra.mxu0 0.0
    %1648 = vmatprep.subr.mxu0 0.0
    %1649 = vmatpush1.msra.mxu0 0.0
    %1650 = vmatprep.subr.mxu0 0.0
    %1651 = vmatpush1.msra.mxu0 0.0
    %1652 = vmatprep.subr.mxu0 0.0
    %1653 = vmatpush1.msra.mxu0 0.0
    %1654 = vmatprep.subr.mxu0 0.0
    %1655 = vmatpush1.msra.mxu0 0.0
    %1656 = vmatprep.subr.mxu0 0.0
    %1657 = vmatpush1.msra.mxu0 0.0
    %1658 = vmatprep.subr.mxu0 0.0
    %1659 = vmatpush1.msra.mxu0 0.0
    %1660 = vmatprep.subr.mxu0 0.0
    %1661 = vmatpush1.msra.mxu0 0.0
    %1662 = vmatprep.subr.mxu0 0.0
    %1663 = vmatpush1.msra.mxu0 0.0
    %1664 = vmatprep.subr.mxu0 0.0
    %1665 = vmatpush1.msra.mxu0 0.0
    %1666 = vmatprep.subr.mxu0 0.0
    %1667 = vmatpush1.msra.mxu0 0.0
    %1668 = vmatprep.subr.mxu0 0.0
    %1669 = vmatpush1.msra.mxu0 0.0
    %1670 = vmatprep.subr.mxu0 0.0
    %1671 = vmatpush1.msra.mxu0 0.0
    %1672 = vmatprep.subr.mxu0 0.0
    %1673 = vmatpush1.msra.mxu0 0.0
    %1674 = vmatprep.subr.mxu0 0.0
    %1675 = vmatpush1.msra.mxu0 0.0
    %1676 = vmatprep.subr.mxu0 0.0
    %1677 = vmatpush1.msra.mxu0 0.0
    %1678 = vmatprep.subr.mxu0 0.0
    %1679 = vmatpush1.msra.mxu0 0.0
    %1680 = vmatprep.subr.mxu0 0.0
    %1681 = vmatpush1.msra.mxu0 0.0
    %1682 = vmatprep.subr.mxu0 0.0
    %1683 = vmatpush1.msra.mxu0 0.0
    %1684 = vmatprep.subr.mxu0 0.0
    %1685 = vmatpush1.msra.mxu0 0.0
    %1686 = vmatprep.subr.mxu0 0.0
    %1687 = vmatpush1.msra.mxu0 0.0
    %1688 = vmatprep.mubr.f32.mxu0 0.0
    %1689 = vmatmul.mubr.f32.gmra.mrb[0].mxu0 %v1622
    %v1690 = vpop.f32.mrb[0].mxu0
    %v1691 = vadd.f32 0.0, %v1690
    %v1692 = vpop.f32.mrb[0].mxu0
    %1693 = vdwg.mxu0
    %1702 = vrot.lane.b32.xlu0 %v427, 64
    %v1703 = vpop.permute.xlu0 %1702
    %1704 = vrot.lane.b32.xlu0 %v428, 64
    %v1705 = vpop.permute.xlu0 %1704
    %1706 = vrot.lane.b32.xlu0 %v429, 64
    %v1707 = vpop.permute.xlu0 %1706
    %1708 = vrot.lane.b32.xlu0 %v430, 64
    %v1709 = vpop.permute.xlu0 %1708
    %1710 = vrot.lane.b32.xlu0 %v431, 64
    %v1711 = vpop.permute.xlu0 %1710
    %1712 = vrot.lane.b32.xlu0 %v432, 64
    %v1713 = vpop.permute.xlu0 %1712
    %1714 = vrot.lane.b32.xlu0 %v433, 64
    %v1715 = vpop.permute.xlu0 %1714
    %1716 = vrot.lane.b32.xlu0 %v434, 64
    %v1717 = vpop.permute.xlu0 %1716
    %v1727 = vsel %vm1387, %v1582, 0
    %1729 = vmatprep.subr.mxu0 0.0
    %1730 = vmatpush1.msra.mxu0 %v1703
    %1731 = vmatprep.subr.mxu0 0.0
    %1732 = vmatpush1.msra.mxu0 %v1705
    %1733 = vmatprep.subr.mxu0 0.0
    %1734 = vmatpush1.msra.mxu0 %v1707
    %1735 = vmatprep.subr.mxu0 0.0
    %1736 = vmatpush1.msra.mxu0 %v1709
    %1737 = vmatprep.subr.mxu0 0.0
    %1738 = vmatpush1.msra.mxu0 %v1711
    %1739 = vmatprep.subr.mxu0 0.0
    %1740 = vmatpush1.msra.mxu0 %v1713
    %1741 = vmatprep.subr.mxu0 0.0
    %1742 = vmatpush1.msra.mxu0 %v1715
    %1743 = vmatprep.subr.mxu0 0.0
    %1744 = vmatpush1.msra.mxu0 %v1717
    %1745 = vmatprep.subr.mxu0 0.0
    %1746 = vmatpush1.msra.mxu0 0.0
    %1747 = vmatprep.subr.mxu0 0.0
    %1748 = vmatpush1.msra.mxu0 0.0
    %1749 = vmatprep.subr.mxu0 0.0
    %1750 = vmatpush1.msra.mxu0 0.0
    %1751 = vmatprep.subr.mxu0 0.0
    %1752 = vmatpush1.msra.mxu0 0.0
    %1753 = vmatprep.subr.mxu0 0.0
    %1754 = vmatpush1.msra.mxu0 0.0
    %1755 = vmatprep.subr.mxu0 0.0
    %1756 = vmatpush1.msra.mxu0 0.0
    %1757 = vmatprep.subr.mxu0 0.0
    %1758 = vmatpush1.msra.mxu0 0.0
    %1759 = vmatprep.subr.mxu0 0.0
    %1760 = vmatpush1.msra.mxu0 0.0
    %1761 = vmatprep.subr.mxu0 0.0
    %1762 = vmatpush1.msra.mxu0 0.0
    %1763 = vmatprep.subr.mxu0 0.0
    %1764 = vmatpush1.msra.mxu0 0.0
    %1765 = vmatprep.subr.mxu0 0.0
    %1766 = vmatpush1.msra.mxu0 0.0
    %1767 = vmatprep.subr.mxu0 0.0
    %1768 = vmatpush1.msra.mxu0 0.0
    %1769 = vmatprep.subr.mxu0 0.0
    %1770 = vmatpush1.msra.mxu0 0.0
    %1771 = vmatprep.subr.mxu0 0.0
    %1772 = vmatpush1.msra.mxu0 0.0
    %1773 = vmatprep.subr.mxu0 0.0
    %1774 = vmatpush1.msra.mxu0 0.0
    %1775 = vmatprep.subr.mxu0 0.0
    %1776 = vmatpush1.msra.mxu0 0.0
    %1777 = vmatprep.subr.mxu0 0.0
    %1778 = vmatpush1.msra.mxu0 0.0
    %1779 = vmatprep.subr.mxu0 0.0
    %1780 = vmatpush1.msra.mxu0 0.0
    %1781 = vmatprep.subr.mxu0 0.0
    %1782 = vmatpush1.msra.mxu0 0.0
    %1783 = vmatprep.subr.mxu0 0.0
    %1784 = vmatpush1.msra.mxu0 0.0
    %1785 = vmatprep.subr.mxu0 0.0
    %1786 = vmatpush1.msra.mxu0 0.0
    %1787 = vmatprep.subr.mxu0 0.0
    %1788 = vmatpush1.msra.mxu0 0.0
    %1789 = vmatprep.subr.mxu0 0.0
    %1790 = vmatpush1.msra.mxu0 0.0
    %1791 = vmatprep.subr.mxu0 0.0
    %1792 = vmatpush1.msra.mxu0 0.0
    %1793 = vmatprep.mubr.f32.mxu0 0.0
    %1794 = vmatmul.mubr.f32.gmra.mrb[0].mxu0 %v1727
    %v1795 = vpop.f32.mrb[0].mxu0
    %v1796 = vadd.f32 0.0, %v1795
    %v1797 = vpop.f32.mrb[0].mxu0
    %1798 = vdwg.mxu0
    %1807 = vrot.lane.b32.xlu0 %v435, 64
    %v1808 = vpop.permute.xlu0 %1807
    %1809 = vrot.lane.b32.xlu0 %v436, 64
    %v1810 = vpop.permute.xlu0 %1809
    %1811 = vrot.lane.b32.xlu0 %v437, 64
    %v1812 = vpop.permute.xlu0 %1811
    %1813 = vrot.lane.b32.xlu0 %v438, 64
    %v1814 = vpop.permute.xlu0 %1813
    %1815 = vrot.lane.b32.xlu0 %v439, 64
    %v1816 = vpop.permute.xlu0 %1815
    %1817 = vrot.lane.b32.xlu0 %v440, 64
    %v1818 = vpop.permute.xlu0 %1817
    %1819 = vrot.lane.b32.xlu0 %v441, 64
    %v1820 = vpop.permute.xlu0 %1819
    %1821 = vrot.lane.b32.xlu0 %v442, 64
    %v1822 = vpop.permute.xlu0 %1821
    %v1832 = vsel %vm1387, %v1583, 0
    %1834 = vmatprep.subr.mxu0 0.0
    %1835 = vmatpush1.msra.mxu0 %v1808
    %1836 = vmatprep.subr.mxu0 0.0
    %1837 = vmatpush1.msra.mxu0 %v1810
    %1838 = vmatprep.subr.mxu0 0.0
    %1839 = vmatpush1.msra.mxu0 %v1812
    %1840 = vmatprep.subr.mxu0 0.0
    %1841 = vmatpush1.msra.mxu0 %v1814
    %1842 = vmatprep.subr.mxu0 0.0
    %1843 = vmatpush1.msra.mxu0 %v1816
    %1844 = vmatprep.subr.mxu0 0.0
    %1845 = vmatpush1.msra.mxu0 %v1818
    %1846 = vmatprep.subr.mxu0 0.0
    %1847 = vmatpush1.msra.mxu0 %v1820
    %1848 = vmatprep.subr.mxu0 0.0
    %1849 = vmatpush1.msra.mxu0 %v1822
    %1850 = vmatprep.subr.mxu0 0.0
    %1851 = vmatpush1.msra.mxu0 0.0
    %1852 = vmatprep.subr.mxu0 0.0
    %1853 = vmatpush1.msra.mxu0 0.0
    %1854 = vmatprep.subr.mxu0 0.0
    %1855 = vmatpush1.msra.mxu0 0.0
    %1856 = vmatprep.subr.mxu0 0.0
    %1857 = vmatpush1.msra.mxu0 0.0
    %1858 = vmatprep.subr.mxu0 0.0
    %1859 = vmatpush1.msra.mxu0 0.0
    %1860 = vmatprep.subr.mxu0 0.0
    %1861 = vmatpush1.msra.mxu0 0.0
    %1862 = vmatprep.subr.mxu0 0.0
    %1863 = vmatpush1.msra.mxu0 0.0
    %1864 = vmatprep.subr.mxu0 0.0
    %1865 = vmatpush1.msra.mxu0 0.0
    %1866 = vmatprep.subr.mxu0 0.0
    %1867 = vmatpush1.msra.mxu0 0.0
    %1868 = vmatprep.subr.mxu0 0.0
    %1869 = vmatpush1.msra.mxu0 0.0
    %1870 = vmatprep.subr.mxu0 0.0
    %1871 = vmatpush1.msra.mxu0 0.0
    %1872 = vmatprep.subr.mxu0 0.0
    %1873 = vmatpush1.msra.mxu0 0.0
    %1874 = vmatprep.subr.mxu0 0.0
    %1875 = vmatpush1.msra.mxu0 0.0
    %1876 = vmatprep.subr.mxu0 0.0
    %1877 = vmatpush1.msra.mxu0 0.0
    %1878 = vmatprep.subr.mxu0 0.0
    %1879 = vmatpush1.msra.mxu0 0.0
    %1880 = vmatprep.subr.mxu0 0.0
    %1881 = vmatpush1.msra.mxu0 0.0
    %1882 = vmatprep.subr.mxu0 0.0
    %1883 = vmatpush1.msra.mxu0 0.0
    %1884 = vmatprep.subr.mxu0 0.0
    %1885 = vmatpush1.msra.mxu0 0.0
    %1886 = vmatprep.subr.mxu0 0.0
    %1887 = vmatpush1.msra.mxu0 0.0
    %1888 = vmatprep.subr.mxu0 0.0
    %1889 = vmatpush1.msra.mxu0 0.0
    %1890 = vmatprep.subr.mxu0 0.0
    %1891 = vmatpush1.msra.mxu0 0.0
    %1892 = vmatprep.subr.mxu0 0.0
    %1893 = vmatpush1.msra.mxu0 0.0
    %1894 = vmatprep.subr.mxu0 0.0
    %1895 = vmatpush1.msra.mxu0 0.0
    %1896 = vmatprep.subr.mxu0 0.0
    %1897 = vmatpush1.msra.mxu0 0.0
    %1898 = vmatprep.mubr.f32.mxu0 0.0
    %1899 = vmatmul.mubr.f32.gmra.mrb[0].mxu0 %v1832
    %v1900 = vpop.f32.mrb[0].mxu0
    %v1901 = vadd.f32 0.0, %v1900
    %v1902 = vpop.f32.mrb[0].mxu0
    %1903 = vdwg.mxu0
    %1912 = vrot.lane.b32.xlu0 %v443, 64
    %v1913 = vpop.permute.xlu0 %1912
    %1914 = vrot.lane.b32.xlu0 %v444, 64
    %v1915 = vpop.permute.xlu0 %1914
    %1916 = vrot.lane.b32.xlu0 %v445, 64
    %v1917 = vpop.permute.xlu0 %1916
    %1918 = vrot.lane.b32.xlu0 %v446, 64
    %v1919 = vpop.permute.xlu0 %1918
    %1920 = vrot.lane.b32.xlu0 %v447, 64
    %v1921 = vpop.permute.xlu0 %1920
    %1922 = vrot.lane.b32.xlu0 %v448, 64
    %v1923 = vpop.permute.xlu0 %1922
    %1924 = vrot.lane.b32.xlu0 %v449, 64
    %v1925 = vpop.permute.xlu0 %1924
    %1926 = vrot.lane.b32.xlu0 %v450, 64
    %v1927 = vpop.permute.xlu0 %1926
    %v1937 = vsel %vm1387, %v1584, 0
    %1939 = vmatprep.subr.mxu0 0.0
    %1940 = vmatpush1.msra.mxu0 %v1913
    %1941 = vmatprep.subr.mxu0 0.0
    %1942 = vmatpush1.msra.mxu0 %v1915
    %1943 = vmatprep.subr.mxu0 0.0
    %1944 = vmatpush1.msra.mxu0 %v1917
    %1945 = vmatprep.subr.mxu0 0.0
    %1946 = vmatpush1.msra.mxu0 %v1919
    %1947 = vmatprep.subr.mxu0 0.0
    %1948 = vmatpush1.msra.mxu0 %v1921
    %1949 = vmatprep.subr.mxu0 0.0
    %1950 = vmatpush1.msra.mxu0 %v1923
    %1951 = vmatprep.subr.mxu0 0.0
    %1952 = vmatpush1.msra.mxu0 %v1925
    %1953 = vmatprep.subr.mxu0 0.0
    %1954 = vmatpush1.msra.mxu0 %v1927
    %1955 = vmatprep.subr.mxu0 0.0
    %1956 = vmatpush1.msra.mxu0 0.0
    %1957 = vmatprep.subr.mxu0 0.0
    %1958 = vmatpush1.msra.mxu0 0.0
    %1959 = vmatprep.subr.mxu0 0.0
    %1960 = vmatpush1.msra.mxu0 0.0
    %1961 = vmatprep.subr.mxu0 0.0
    %1962 = vmatpush1.msra.mxu0 0.0
    %1963 = vmatprep.subr.mxu0 0.0
    %1964 = vmatpush1.msra.mxu0 0.0
    %1965 = vmatprep.subr.mxu0 0.0
    %1966 = vmatpush1.msra.mxu0 0.0
    %1967 = vmatprep.subr.mxu0 0.0
    %1968 = vmatpush1.msra.mxu0 0.0
    %1969 = vmatprep.subr.mxu0 0.0
    %1970 = vmatpush1.msra.mxu0 0.0
    %1971 = vmatprep.subr.mxu0 0.0
    %1972 = vmatpush1.msra.mxu0 0.0
    %1973 = vmatprep.subr.mxu0 0.0
    %1974 = vmatpush1.msra.mxu0 0.0
    %1975 = vmatprep.subr.mxu0 0.0
    %1976 = vmatpush1.msra.mxu0 0.0
    %1977 = vmatprep.subr.mxu0 0.0
    %1978 = vmatpush1.msra.mxu0 0.0
    %1979 = vmatprep.subr.mxu0 0.0
    %1980 = vmatpush1.msra.mxu0 0.0
    %1981 = vmatprep.subr.mxu0 0.0
    %1982 = vmatpush1.msra.mxu0 0.0
    %1983 = vmatprep.subr.mxu0 0.0
    %1984 = vmatpush1.msra.mxu0 0.0
    %1985 = vmatprep.subr.mxu0 0.0
    %1986 = vmatpush1.msra.mxu0 0.0
    %1987 = vmatprep.subr.mxu0 0.0
    %1988 = vmatpush1.msra.mxu0 0.0
    %1989 = vmatprep.subr.mxu0 0.0
    %1990 = vmatpush1.msra.mxu0 0.0
    %1991 = vmatprep.subr.mxu0 0.0
    %1992 = vmatpush1.msra.mxu0 0.0
    %1993 = vmatprep.subr.mxu0 0.0
    %1994 = vmatpush1.msra.mxu0 0.0
    %1995 = vmatprep.subr.mxu0 0.0
    %1996 = vmatpush1.msra.mxu0 0.0
    %1997 = vmatprep.subr.mxu0 0.0
    %1998 = vmatpush1.msra.mxu0 0.0
    %1999 = vmatprep.subr.mxu0 0.0
    %2000 = vmatpush1.msra.mxu0 0.0
    %2001 = vmatprep.subr.mxu0 0.0
    %2002 = vmatpush1.msra.mxu0 0.0
    %2003 = vmatprep.mubr.f32.mxu0 0.0
    %2004 = vmatmul.mubr.f32.gmra.mrb[0].mxu0 %v1937
    %v2005 = vpop.f32.mrb[0].mxu0
    %v2006 = vadd.f32 0.0, %v2005
    %v2007 = vpop.f32.mrb[0].mxu0
    %2008 = vdwg.mxu0
    %2017 = vrot.lane.b32.xlu0 %v451, 64
    %v2018 = vpop.permute.xlu0 %2017
    %2019 = vrot.lane.b32.xlu0 %v452, 64
    %v2020 = vpop.permute.xlu0 %2019
    %2021 = vrot.lane.b32.xlu0 %v453, 64
    %v2022 = vpop.permute.xlu0 %2021
    %2023 = vrot.lane.b32.xlu0 %v454, 64
    %v2024 = vpop.permute.xlu0 %2023
    %2025 = vrot.lane.b32.xlu0 %v455, 64
    %v2026 = vpop.permute.xlu0 %2025
    %2027 = vrot.lane.b32.xlu0 %v456, 64
    %v2028 = vpop.permute.xlu0 %2027
    %2029 = vrot.lane.b32.xlu0 %v457, 64
    %v2030 = vpop.permute.xlu0 %2029
    %2031 = vrot.lane.b32.xlu0 %v458, 64
    %v2032 = vpop.permute.xlu0 %2031
    %v2042 = vsel %vm1387, %v1585, 0
    %2044 = vmatprep.subr.mxu0 0.0
    %2045 = vmatpush1.msra.mxu0 %v2018
    %2046 = vmatprep.subr.mxu0 0.0
    %2047 = vmatpush1.msra.mxu0 %v2020
    %2048 = vmatprep.subr.mxu0 0.0
    %2049 = vmatpush1.msra.mxu0 %v2022
    %2050 = vmatprep.subr.mxu0 0.0
    %2051 = vmatpush1.msra.mxu0 %v2024
    %2052 = vmatprep.subr.mxu0 0.0
    %2053 = vmatpush1.msra.mxu0 %v2026
    %2054 = vmatprep.subr.mxu0 0.0
    %2055 = vmatpush1.msra.mxu0 %v2028
    %2056 = vmatprep.subr.mxu0 0.0
    %2057 = vmatpush1.msra.mxu0 %v2030
    %2058 = vmatprep.subr.mxu0 0.0
    %2059 = vmatpush1.msra.mxu0 %v2032
    %2060 = vmatprep.subr.mxu0 0.0
    %2061 = vmatpush1.msra.mxu0 0.0
    %2062 = vmatprep.subr.mxu0 0.0
    %2063 = vmatpush1.msra.mxu0 0.0
    %2064 = vmatprep.subr.mxu0 0.0
    %2065 = vmatpush1.msra.mxu0 0.0
    %2066 = vmatprep.subr.mxu0 0.0
    %2067 = vmatpush1.msra.mxu0 0.0
    %2068 = vmatprep.subr.mxu0 0.0
    %2069 = vmatpush1.msra.mxu0 0.0
    %2070 = vmatprep.subr.mxu0 0.0
    %2071 = vmatpush1.msra.mxu0 0.0
    %2072 = vmatprep.subr.mxu0 0.0
    %2073 = vmatpush1.msra.mxu0 0.0
    %2074 = vmatprep.subr.mxu0 0.0
    %2075 = vmatpush1.msra.mxu0 0.0
    %2076 = vmatprep.subr.mxu0 0.0
    %2077 = vmatpush1.msra.mxu0 0.0
    %2078 = vmatprep.subr.mxu0 0.0
    %2079 = vmatpush1.msra.mxu0 0.0
    %2080 = vmatprep.subr.mxu0 0.0
    %2081 = vmatpush1.msra.mxu0 0.0
    %2082 = vmatprep.subr.mxu0 0.0
    %2083 = vmatpush1.msra.mxu0 0.0
    %2084 = vmatprep.subr.mxu0 0.0
    %2085 = vmatpush1.msra.mxu0 0.0
    %2086 = vmatprep.subr.mxu0 0.0
    %2087 = vmatpush1.msra.mxu0 0.0
    %2088 = vmatprep.subr.mxu0 0.0
    %2089 = vmatpush1.msra.mxu0 0.0
    %2090 = vmatprep.subr.mxu0 0.0
    %2091 = vmatpush1.msra.mxu0 0.0
    %2092 = vmatprep.subr.mxu0 0.0
    %2093 = vmatpush1.msra.mxu0 0.0
    %2094 = vmatprep.subr.mxu0 0.0
    %2095 = vmatpush1.msra.mxu0 0.0
    %2096 = vmatprep.subr.mxu0 0.0
    %2097 = vmatpush1.msra.mxu0 0.0
    %2098 = vmatprep.subr.mxu0 0.0
    %2099 = vmatpush1.msra.mxu0 0.0
    %2100 = vmatprep.subr.mxu0 0.0
    %2101 = vmatpush1.msra.mxu0 0.0
    %2102 = vmatprep.subr.mxu0 0.0
    %2103 = vmatpush1.msra.mxu0 0.0
    %2104 = vmatprep.subr.mxu0 0.0
    %2105 = vmatpush1.msra.mxu0 0.0
    %2106 = vmatprep.subr.mxu0 0.0
    %2107 = vmatpush1.msra.mxu0 0.0
    %2108 = vmatprep.mubr.f32.mxu0 0.0
    %2109 = vmatmul.mubr.f32.gmra.mrb[0].mxu0 %v2042
    %v2110 = vpop.f32.mrb[0].mxu0
    %v2111 = vadd.f32 0.0, %v2110
    %v2112 = vpop.f32.mrb[0].mxu0
    %2113 = vdwg.mxu0
    %2122 = vrot.lane.b32.xlu0 %v459, 64
    %v2123 = vpop.permute.xlu0 %2122
    %2124 = vrot.lane.b32.xlu0 %v460, 64
    %v2125 = vpop.permute.xlu0 %2124
    %2126 = vrot.lane.b32.xlu0 %v461, 64
    %v2127 = vpop.permute.xlu0 %2126
    %2128 = vrot.lane.b32.xlu0 %v462, 64
    %v2129 = vpop.permute.xlu0 %2128
    %2130 = vrot.lane.b32.xlu0 %v463, 64
    %v2131 = vpop.permute.xlu0 %2130
    %2132 = vrot.lane.b32.xlu0 %v464, 64
    %v2133 = vpop.permute.xlu0 %2132
    %2134 = vrot.lane.b32.xlu0 %v465, 64
    %v2135 = vpop.permute.xlu0 %2134
    %2136 = vrot.lane.b32.xlu0 %v466, 64
    %v2137 = vpop.permute.xlu0 %2136
    %v2147 = vsel %vm1387, %v1586, 0
    %2149 = vmatprep.subr.mxu0 0.0
    %2150 = vmatpush1.msra.mxu0 %v2123
    %2151 = vmatprep.subr.mxu0 0.0
    %2152 = vmatpush1.msra.mxu0 %v2125
    %2153 = vmatprep.subr.mxu0 0.0
    %2154 = vmatpush1.msra.mxu0 %v2127
    %2155 = vmatprep.subr.mxu0 0.0
    %2156 = vmatpush1.msra.mxu0 %v2129
    %2157 = vmatprep.subr.mxu0 0.0
    %2158 = vmatpush1.msra.mxu0 %v2131
    %2159 = vmatprep.subr.mxu0 0.0
    %2160 = vmatpush1.msra.mxu0 %v2133
    %2161 = vmatprep.subr.mxu0 0.0
    %2162 = vmatpush1.msra.mxu0 %v2135
    %2163 = vmatprep.subr.mxu0 0.0
    %2164 = vmatpush1.msra.mxu0 %v2137
    %2165 = vmatprep.subr.mxu0 0.0
    %2166 = vmatpush1.msra.mxu0 0.0
    %2167 = vmatprep.subr.mxu0 0.0
    %2168 = vmatpush1.msra.mxu0 0.0
    %2169 = vmatprep.subr.mxu0 0.0
    %2170 = vmatpush1.msra.mxu0 0.0
    %2171 = vmatprep.subr.mxu0 0.0
    %2172 = vmatpush1.msra.mxu0 0.0
    %2173 = vmatprep.subr.mxu0 0.0
    %2174 = vmatpush1.msra.mxu0 0.0
    %2175 = vmatprep.subr.mxu0 0.0
    %2176 = vmatpush1.msra.mxu0 0.0
    %2177 = vmatprep.subr.mxu0 0.0
    %2178 = vmatpush1.msra.mxu0 0.0
    %2179 = vmatprep.subr.mxu0 0.0
    %2180 = vmatpush1.msra.mxu0 0.0
    %2181 = vmatprep.subr.mxu0 0.0
    %2182 = vmatpush1.msra.mxu0 0.0
    %2183 = vmatprep.subr.mxu0 0.0
    %2184 = vmatpush1.msra.mxu0 0.0
    %2185 = vmatprep.subr.mxu0 0.0
    %2186 = vmatpush1.msra.mxu0 0.0
    %2187 = vmatprep.subr.mxu0 0.0
    %2188 = vmatpush1.msra.mxu0 0.0
    %2189 = vmatprep.subr.mxu0 0.0
    %2190 = vmatpush1.msra.mxu0 0.0
    %2191 = vmatprep.subr.mxu0 0.0
    %2192 = vmatpush1.msra.mxu0 0.0
    %2193 = vmatprep.subr.mxu0 0.0
    %2194 = vmatpush1.msra.mxu0 0.0
    %2195 = vmatprep.subr.mxu0 0.0
    %2196 = vmatpush1.msra.mxu0 0.0
    %2197 = vmatprep.subr.mxu0 0.0
    %2198 = vmatpush1.msra.mxu0 0.0
    %2199 = vmatprep.subr.mxu0 0.0
    %2200 = vmatpush1.msra.mxu0 0.0
    %2201 = vmatprep.subr.mxu0 0.0
    %2202 = vmatpush1.msra.mxu0 0.0
    %2203 = vmatprep.subr.mxu0 0.0
    %2204 = vmatpush1.msra.mxu0 0.0
    %2205 = vmatprep.subr.mxu0 0.0
    %2206 = vmatpush1.msra.mxu0 0.0
    %2207 = vmatprep.subr.mxu0 0.0
    %2208 = vmatpush1.msra.mxu0 0.0
    %2209 = vmatprep.subr.mxu0 0.0
    %2210 = vmatpush1.msra.mxu0 0.0
    %2211 = vmatprep.subr.mxu0 0.0
    %2212 = vmatpush1.msra.mxu0 0.0
    %2213 = vmatprep.mubr.f32.mxu0 0.0
    %2214 = vmatmul.mubr.f32.gmra.mrb[0].mxu0 %v2147
    %v2215 = vpop.f32.mrb[0].mxu0
    %v2216 = vadd.f32 0.0, %v2215
    %v2217 = vpop.f32.mrb[0].mxu0
    %2218 = vdwg.mxu0
    %2227 = vrot.lane.b32.xlu0 %v467, 64
    %v2228 = vpop.permute.xlu0 %2227
    %2229 = vrot.lane.b32.xlu0 %v468, 64
    %v2230 = vpop.permute.xlu0 %2229
    %2231 = vrot.lane.b32.xlu0 %v469, 64
    %v2232 = vpop.permute.xlu0 %2231
    %2233 = vrot.lane.b32.xlu0 %v470, 64
    %v2234 = vpop.permute.xlu0 %2233
    %2235 = vrot.lane.b32.xlu0 %v471, 64
    %v2236 = vpop.permute.xlu0 %2235
    %2237 = vrot.lane.b32.xlu0 %v472, 64
    %v2238 = vpop.permute.xlu0 %2237
    %2239 = vrot.lane.b32.xlu0 %v473, 64
    %v2240 = vpop.permute.xlu0 %2239
    %2241 = vrot.lane.b32.xlu0 %v474, 64
    %v2242 = vpop.permute.xlu0 %2241
    %v2252 = vsel %vm1387, %v1587, 0
    %2254 = vmatprep.subr.mxu0 0.0
    %2255 = vmatpush1.msra.mxu0 %v2228
    %2256 = vmatprep.subr.mxu0 0.0
    %2257 = vmatpush1.msra.mxu0 %v2230
    %2258 = vmatprep.subr.mxu0 0.0
    %2259 = vmatpush1.msra.mxu0 %v2232
    %2260 = vmatprep.subr.mxu0 0.0
    %2261 = vmatpush1.msra.mxu0 %v2234
    %2262 = vmatprep.subr.mxu0 0.0
    %2263 = vmatpush1.msra.mxu0 %v2236
    %2264 = vmatprep.subr.mxu0 0.0
    %2265 = vmatpush1.msra.mxu0 %v2238
    %2266 = vmatprep.subr.mxu0 0.0
    %2267 = vmatpush1.msra.mxu0 %v2240
    %2268 = vmatprep.subr.mxu0 0.0
    %2269 = vmatpush1.msra.mxu0 %v2242
    %2270 = vmatprep.subr.mxu0 0.0
    %2271 = vmatpush1.msra.mxu0 0.0
    %2272 = vmatprep.subr.mxu0 0.0
    %2273 = vmatpush1.msra.mxu0 0.0
    %2274 = vmatprep.subr.mxu0 0.0
    %2275 = vmatpush1.msra.mxu0 0.0
    %2276 = vmatprep.subr.mxu0 0.0
    %2277 = vmatpush1.msra.mxu0 0.0
    %2278 = vmatprep.subr.mxu0 0.0
    %2279 = vmatpush1.msra.mxu0 0.0
    %2280 = vmatprep.subr.mxu0 0.0
    %2281 = vmatpush1.msra.mxu0 0.0
    %2282 = vmatprep.subr.mxu0 0.0
    %2283 = vmatpush1.msra.mxu0 0.0
    %2284 = vmatprep.subr.mxu0 0.0
    %2285 = vmatpush1.msra.mxu0 0.0
    %2286 = vmatprep.subr.mxu0 0.0
    %2287 = vmatpush1.msra.mxu0 0.0
    %2288 = vmatprep.subr.mxu0 0.0
    %2289 = vmatpush1.msra.mxu0 0.0
    %2290 = vmatprep.subr.mxu0 0.0
    %2291 = vmatpush1.msra.mxu0 0.0
    %2292 = vmatprep.subr.mxu0 0.0
    %2293 = vmatpush1.msra.mxu0 0.0
    %2294 = vmatprep.subr.mxu0 0.0
    %2295 = vmatpush1.msra.mxu0 0.0
    %2296 = vmatprep.subr.mxu0 0.0
    %2297 = vmatpush1.msra.mxu0 0.0
    %2298 = vmatprep.subr.mxu0 0.0
    %2299 = vmatpush1.msra.mxu0 0.0
    %2300 = vmatprep.subr.mxu0 0.0
    %2301 = vmatpush1.msra.mxu0 0.0
    %2302 = vmatprep.subr.mxu0 0.0
    %2303 = vmatpush1.msra.mxu0 0.0
    %2304 = vmatprep.subr.mxu0 0.0
    %2305 = vmatpush1.msra.mxu0 0.0
    %2306 = vmatprep.subr.mxu0 0.0
    %2307 = vmatpush1.msra.mxu0 0.0
    %2308 = vmatprep.subr.mxu0 0.0
    %2309 = vmatpush1.msra.mxu0 0.0
    %2310 = vmatprep.subr.mxu0 0.0
    %2311 = vmatpush1.msra.mxu0 0.0
    %2312 = vmatprep.subr.mxu0 0.0
    %2313 = vmatpush1.msra.mxu0 0.0
    %2314 = vmatprep.subr.mxu0 0.0
    %2315 = vmatpush1.msra.mxu0 0.0
    %2316 = vmatprep.subr.mxu0 0.0
    %2317 = vmatpush1.msra.mxu0 0.0
    %2318 = vmatprep.mubr.f32.mxu0 0.0
    %2319 = vmatmul.mubr.f32.gmra.mrb[0].mxu0 %v2252
    %v2320 = vpop.f32.mrb[0].mxu0
    %v2321 = vadd.f32 0.0, %v2320
    %v2322 = vpop.f32.mrb[0].mxu0
    %2323 = vdwg.mxu0
    %2332 = vrot.lane.b32.xlu0 %v475, 64
    %v2333 = vpop.permute.xlu0 %2332
    %2334 = vrot.lane.b32.xlu0 %v476, 64
    %v2335 = vpop.permute.xlu0 %2334
    %2336 = vrot.lane.b32.xlu0 %v477, 64
    %v2337 = vpop.permute.xlu0 %2336
    %2338 = vrot.lane.b32.xlu0 %v478, 64
    %v2339 = vpop.permute.xlu0 %2338
    %2340 = vrot.lane.b32.xlu0 %v479, 64
    %v2341 = vpop.permute.xlu0 %2340
    %2342 = vrot.lane.b32.xlu0 %v480, 64
    %v2343 = vpop.permute.xlu0 %2342
    %2344 = vrot.lane.b32.xlu0 %v481, 64
    %v2345 = vpop.permute.xlu0 %2344
    %2346 = vrot.lane.b32.xlu0 %v482, 64
    %v2347 = vpop.permute.xlu0 %2346
    %v2357 = vsel %vm1387, %v1588, 0
    %2359 = vmatprep.subr.mxu0 0.0
    %2360 = vmatpush1.msra.mxu0 %v2333
    %2361 = vmatprep.subr.mxu0 0.0
    %2362 = vmatpush1.msra.mxu0 %v2335
    %2363 = vmatprep.subr.mxu0 0.0
    %2364 = vmatpush1.msra.mxu0 %v2337
    %2365 = vmatprep.subr.mxu0 0.0
    %2366 = vmatpush1.msra.mxu0 %v2339
    %2367 = vmatprep.subr.mxu0 0.0
    %2368 = vmatpush1.msra.mxu0 %v2341
    %2369 = vmatprep.subr.mxu0 0.0
    %2370 = vmatpush1.msra.mxu0 %v2343
    %2371 = vmatprep.subr.mxu0 0.0
    %2372 = vmatpush1.msra.mxu0 %v2345
    %2373 = vmatprep.subr.mxu0 0.0
    %2374 = vmatpush1.msra.mxu0 %v2347
    %2375 = vmatprep.subr.mxu0 0.0
    %2376 = vmatpush1.msra.mxu0 0.0
    %2377 = vmatprep.subr.mxu0 0.0
    %2378 = vmatpush1.msra.mxu0 0.0
    %2379 = vmatprep.subr.mxu0 0.0
    %2380 = vmatpush1.msra.mxu0 0.0
    %2381 = vmatprep.subr.mxu0 0.0
    %2382 = vmatpush1.msra.mxu0 0.0
    %2383 = vmatprep.subr.mxu0 0.0
    %2384 = vmatpush1.msra.mxu0 0.0
    %2385 = vmatprep.subr.mxu0 0.0
    %2386 = vmatpush1.msra.mxu0 0.0
    %2387 = vmatprep.subr.mxu0 0.0
    %2388 = vmatpush1.msra.mxu0 0.0
    %2389 = vmatprep.subr.mxu0 0.0
    %2390 = vmatpush1.msra.mxu0 0.0
    %2391 = vmatprep.subr.mxu0 0.0
    %2392 = vmatpush1.msra.mxu0 0.0
    %2393 = vmatprep.subr.mxu0 0.0
    %2394 = vmatpush1.msra.mxu0 0.0
    %2395 = vmatprep.subr.mxu0 0.0
    %2396 = vmatpush1.msra.mxu0 0.0
    %2397 = vmatprep.subr.mxu0 0.0
    %2398 = vmatpush1.msra.mxu0 0.0
    %2399 = vmatprep.subr.mxu0 0.0
    %2400 = vmatpush1.msra.mxu0 0.0
    %2401 = vmatprep.subr.mxu0 0.0
    %2402 = vmatpush1.msra.mxu0 0.0
    %2403 = vmatprep.subr.mxu0 0.0
    %2404 = vmatpush1.msra.mxu0 0.0
    %2405 = vmatprep.subr.mxu0 0.0
    %2406 = vmatpush1.msra.mxu0 0.0
    %2407 = vmatprep.subr.mxu0 0.0
    %2408 = vmatpush1.msra.mxu0 0.0
    %2409 = vmatprep.subr.mxu0 0.0
    %2410 = vmatpush1.msra.mxu0 0.0
    %2411 = vmatprep.subr.mxu0 0.0
    %2412 = vmatpush1.msra.mxu0 0.0
    %2413 = vmatprep.subr.mxu0 0.0
    %2414 = vmatpush1.msra.mxu0 0.0
    %2415 = vmatprep.subr.mxu0 0.0
    %2416 = vmatpush1.msra.mxu0 0.0
    %2417 = vmatprep.subr.mxu0 0.0
    %2418 = vmatpush1.msra.mxu0 0.0
    %2419 = vmatprep.subr.mxu0 0.0
    %2420 = vmatpush1.msra.mxu0 0.0
    %2421 = vmatprep.subr.mxu0 0.0
    %2422 = vmatpush1.msra.mxu0 0.0
    %2423 = vmatprep.mubr.f32.mxu0 0.0
    %2424 = vmatmul.mubr.f32.gmra.mrb[0].mxu0 %v2357
    %v2425 = vpop.f32.mrb[0].mxu0
    %v2426 = vadd.f32 0.0, %v2425
    %v2427 = vpop.f32.mrb[0].mxu0
    %2428 = vdwg.mxu0
    %v2429 = vld [vmem:[%s6] sm:$0xff]
    %v2430 = vld [vmem:[%s6 + $0x8] sm:$0xff]
    %v2431 = vld [vmem:[%s6 + $0x10] sm:$0xff]
    %v2432 = vld [vmem:[%s6 + $0x18] sm:$0xff]
    %v2433 = vld [vmem:[%s7] sm:$0x1]
    %v2435 = vlaneseq
    %v2436 = vshrl.u32 %v2435, 7
    %v2437 = vsub.s32 0, %v2436
    %v2438 = vrot.slane %v2433, %v2437
    %v2441 = vsel %vm161, %v1691, 0
    %v2444 = vsel %vm161, %v1796, 0
    %v2447 = vsel %vm161, %v1901, 0
    %v2450 = vsel %vm161, %v2006, 0
    %v2453 = vsel %vm161, %v2111, 0
    %v2456 = vsel %vm161, %v2216, 0
    %v2459 = vsel %vm161, %v2321, 0
    %v2462 = vsel %vm161, %v2426, 0
    %2464 = vmatprep.subr.mxu0 0.0
    %2465 = vmatpush1.msra.mxu0 %v2429
    %2466 = vmatprep.subr.mxu0 0.0
    %2467 = vmatpush1.msra.mxu0 %v2430
    %2468 = vmatprep.subr.mxu0 0.0
    %2469 = vmatpush1.msra.mxu0 %v2431
    %2470 = vmatprep.subr.mxu0 0.0
    %2471 = vmatpush1.msra.mxu0 %v2432
    %2472 = vmatprep.subr.mxu0 0.0
    %2473 = vmatpush1.msra.mxu0 0.0
    %2474 = vmatprep.subr.mxu0 0.0
    %2475 = vmatpush1.msra.mxu0 0.0
    %2476 = vmatprep.subr.mxu0 0.0
    %2477 = vmatpush1.msra.mxu0 0.0
    %2478 = vmatprep.subr.mxu0 0.0
    %2479 = vmatpush1.msra.mxu0 0.0
    %2480 = vmatprep.subr.mxu0 0.0
    %2481 = vmatpush1.msra.mxu0 0.0
    %2482 = vmatprep.subr.mxu0 0.0
    %2483 = vmatpush1.msra.mxu0 0.0
    %2484 = vmatprep.subr.mxu0 0.0
    %2485 = vmatpush1.msra.mxu0 0.0
    %2486 = vmatprep.subr.mxu0 0.0
    %2487 = vmatpush1.msra.mxu0 0.0
    %2488 = vmatprep.subr.mxu0 0.0
    %2489 = vmatpush1.msra.mxu0 0.0
    %2490 = vmatprep.subr.mxu0 0.0
    %2491 = vmatpush1.msra.mxu0 0.0
    %2492 = vmatprep.subr.mxu0 0.0
    %2493 = vmatpush1.msra.mxu0 0.0
    %2494 = vmatprep.subr.mxu0 0.0
    %2495 = vmatpush1.msra.mxu0 0.0
    %2496 = vmatprep.subr.mxu0 0.0
    %2497 = vmatpush1.msra.mxu0 0.0
    %2498 = vmatprep.subr.mxu0 0.0
    %2499 = vmatpush1.msra.mxu0 0.0
    %2500 = vmatprep.subr.mxu0 0.0
    %2501 = vmatpush1.msra.mxu0 0.0
    %2502 = vmatprep.subr.mxu0 0.0
    %2503 = vmatpush1.msra.mxu0 0.0
    %2504 = vmatprep.subr.mxu0 0.0
    %2505 = vmatpush1.msra.mxu0 0.0
    %2506 = vmatprep.subr.mxu0 0.0
    %2507 = vmatpush1.msra.mxu0 0.0
    %2508 = vmatprep.subr.mxu0 0.0
    %2509 = vmatpush1.msra.mxu0 0.0
    %2510 = vmatprep.subr.mxu0 0.0
    %2511 = vmatpush1.msra.mxu0 0.0
    %2512 = vmatprep.subr.mxu0 0.0
    %2513 = vmatpush1.msra.mxu0 0.0
    %2514 = vmatprep.subr.mxu0 0.0
    %2515 = vmatpush1.msra.mxu0 0.0
    %2516 = vmatprep.subr.mxu0 0.0
    %2517 = vmatpush1.msra.mxu0 0.0
    %2518 = vmatprep.subr.mxu0 0.0
    %2519 = vmatpush1.msra.mxu0 0.0
    %2520 = vmatprep.subr.mxu0 0.0
    %2521 = vmatpush1.msra.mxu0 0.0
    %2522 = vmatprep.subr.mxu0 0.0
    %2523 = vmatpush1.msra.mxu0 0.0
    %2524 = vmatprep.subr.mxu0 0.0
    %2525 = vmatpush1.msra.mxu0 0.0
    %2526 = vmatprep.subr.mxu0 0.0
    %2527 = vmatpush1.msra.mxu0 0.0
    %2528 = vmatprep.mubr.f32.mxu0 0.0
    %2529 = vmatmul.mubr.f32.gmra.mrb[0].mxu0 %v2441
    %v2530 = vpop.f32.mrb[0].mxu0
    %v2531 = vadd.f32 %v2438, %v2530
    %v2532 = vpop.f32.mrb[0].mxu0
    %2533 = vmatprep.mubr.f32.mxu0 0.0
    %2534 = vmatmul.mubr.f32.gmra.mrb[0].mxu0 %v2444
    %v2535 = vpop.f32.mrb[0].mxu0
    %v2536 = vadd.f32 %v2438, %v2535
    %v2537 = vpop.f32.mrb[0].mxu0
    %2538 = vmatprep.mubr.f32.mxu0 0.0
    %2539 = vmatmul.mubr.f32.gmra.mrb[0].mxu0 %v2447
    %v2540 = vpop.f32.mrb[0].mxu0
    %v2541 = vadd.f32 %v2438, %v2540
    %v2542 = vpop.f32.mrb[0].mxu0
    %2543 = vmatprep.mubr.f32.mxu0 0.0
    %2544 = vmatmul.mubr.f32.gmra.mrb[0].mxu0 %v2450
    %v2545 = vpop.f32.mrb[0].mxu0
    %v2546 = vadd.f32 %v2438, %v2545
    %v2547 = vpop.f32.mrb[0].mxu0
    %2548 = vmatprep.mubr.f32.mxu0 0.0
    %2549 = vmatmul.mubr.f32.gmra.mrb[0].mxu0 %v2453
    %v2550 = vpop.f32.mrb[0].mxu0
    %v2551 = vadd.f32 %v2438, %v2550
    %v2552 = vpop.f32.mrb[0].mxu0
    %2553 = vmatprep.mubr.f32.mxu0 0.0
    %2554 = vmatmul.mubr.f32.gmra.mrb[0].mxu0 %v2456
    %v2555 = vpop.f32.mrb[0].mxu0
    %v2556 = vadd.f32 %v2438, %v2555
    %v2557 = vpop.f32.mrb[0].mxu0
    %2558 = vmatprep.mubr.f32.mxu0 0.0
    %2559 = vmatmul.mubr.f32.gmra.mrb[0].mxu0 %v2459
    %v2560 = vpop.f32.mrb[0].mxu0
    %v2561 = vadd.f32 %v2438, %v2560
    %v2562 = vpop.f32.mrb[0].mxu0
    %2563 = vmatprep.mubr.f32.mxu0 0.0
    %2564 = vmatmul.mubr.f32.gmra.mrb[0].mxu0 %v2462
    %v2565 = vpop.f32.mrb[0].mxu0
    %v2566 = vadd.f32 %v2438, %v2565
    %v2567 = vpop.f32.mrb[0].mxu0
    %2568 = vdwg.mxu0
    %v2577 = vrot.slane %v2536, 7
    %vm2578 = vcmask 1041409
    %v2579 = vsel %vm2578, %v2577, %v2531
    %v2580 = vrot.slane %v2541, 6
    %vm2581 = vcmask 1042434
    %v2582 = vsel %vm2581, %v2580, %v2579
    %v2583 = vrot.slane %v2546, 5
    %vm2584 = vcmask 1043459
    %v2585 = vsel %vm2584, %v2583, %v2582
    %v2586 = vrot.slane %v2551, 4
    %vm2587 = vcmask 1044484
    %v2588 = vsel %vm2587, %v2586, %v2585
    %v2589 = vrot.slane %v2556, 3
    %vm2590 = vcmask 1045509
    %v2591 = vsel %vm2590, %v2589, %v2588
    %v2592 = vrot.slane %v2561, 2
    %vm2593 = vcmask 1046534
    %v2594 = vsel %vm2593, %v2592, %v2591
    %v2595 = vrot.slane %v2566, 1
    %vm2596 = vcmask 1047559
    %v2597 = vsel %vm2596, %v2595, %v2594
    %2599 = vst.msk [vmem:[#allocation3] sm:$0xff] %vm161, %v2597
    %v2600 = vrot.slane %v2531, 1
    %v2601 = vsel %vm2578, %v2536, %v2600
    %v2602 = vrot.slane %v2541, 7
    %v2603 = vsel %vm2581, %v2602, %v2601
    %v2604 = vrot.slane %v2546, 6
    %v2605 = vsel %vm2584, %v2604, %v2603
    %v2606 = vrot.slane %v2551, 5
    %v2607 = vsel %vm2587, %v2606, %v2605
    %v2608 = vrot.slane %v2556, 4
    %v2609 = vsel %vm2590, %v2608, %v2607
    %v2610 = vrot.slane %v2561, 3
    %v2611 = vsel %vm2593, %v2610, %v2609
    %v2612 = vrot.slane %v2566, 2
    %v2613 = vsel %vm2596, %v2612, %v2611
    %2614 = vrot.lane.b32.xlu0 %v2613, 32
    %v2615 = vpop.permute.xlu0 %2614
    %vm2617 = vcmask 523520
    %2618 = vst.msk [vmem:[#allocation3] sm:$0xff] %vm2617, %v2615
    %v2619 = vrot.slane %v2531, 2
    %v2620 = vrot.slane %v2536, 1
    %v2621 = vsel %vm2578, %v2620, %v2619
    %v2622 = vsel %vm2581, %v2541, %v2621
    %v2623 = vrot.slane %v2546, 7
    %v2624 = vsel %vm2584, %v2623, %v2622
    %v2625 = vrot.slane %v2551, 6
    %v2626 = vsel %vm2587, %v2625, %v2624
    %v2627 = vrot.slane %v2556, 5
    %v2628 = vsel %vm2590, %v2627, %v2626
    %v2629 = vrot.slane %v2561, 4
    %v2630 = vsel %vm2593, %v2629, %v2628
    %v2631 = vrot.slane %v2566, 3
    %v2632 = vsel %vm2596, %v2631, %v2630
    %2633 = vrot.lane.b32.xlu0 %v2632, 64
    %v2634 = vpop.permute.xlu0 %2633
    %vm2636 = vcmask 785920
    %2637 = vst.msk [vmem:[#allocation3] sm:$0xff] %vm2636, %v2634
    %v2638 = vrot.slane %v2531, 3
    %v2639 = vrot.slane %v2536, 2
    %v2640 = vsel %vm2578, %v2639, %v2638
    %v2641 = vrot.slane %v2541, 1
    %v2642 = vsel %vm2581, %v2641, %v2640
    %v2643 = vsel %vm2584, %v2546, %v2642
    %v2644 = vrot.slane %v2551, 7
    %v2645 = vsel %vm2587, %v2644, %v2643
    %v2646 = vrot.slane %v2556, 6
    %v2647 = vsel %vm2590, %v2646, %v2645
    %v2648 = vrot.slane %v2561, 5
    %v2649 = vsel %vm2593, %v2648, %v2647
    %v2650 = vrot.slane %v2566, 4
    %v2651 = vsel %vm2596, %v2650, %v2649
    %2652 = vrot.lane.b32.xlu0 %v2651, 96
    %v2653 = vpop.permute.xlu0 %2652
    %vm2655 = vcmask 1048320
    %2656 = vst.msk [vmem:[#allocation3] sm:$0xff] %vm2655, %v2653
    %v2657 = vrot.slane %v2531, 4
    %v2658 = vrot.slane %v2536, 3
    %v2659 = vsel %vm2578, %v2658, %v2657
    %v2660 = vrot.slane %v2541, 2
    %v2661 = vsel %vm2581, %v2660, %v2659
    %v2662 = vrot.slane %v2546, 1
    %v2663 = vsel %vm2584, %v2662, %v2661
    %v2664 = vsel %vm2587, %v2551, %v2663
    %v2665 = vrot.slane %v2556, 7
    %v2666 = vsel %vm2590, %v2665, %v2664
    %v2667 = vrot.slane %v2561, 6
    %v2668 = vsel %vm2593, %v2667, %v2666
    %v2669 = vrot.slane %v2566, 5
    %v2670 = vsel %vm2596, %v2669, %v2668
    %2672 = vst.msk [vmem:[#allocation3 + $0x8] sm:$0xff] %vm161, %v2670
    %v2673 = vrot.slane %v2531, 5
    %v2674 = vrot.slane %v2536, 4
    %v2675 = vsel %vm2578, %v2674, %v2673
    %v2676 = vrot.slane %v2541, 3
    %v2677 = vsel %vm2581, %v2676, %v2675
    %v2678 = vrot.slane %v2546, 2
    %v2679 = vsel %vm2584, %v2678, %v2677
    %v2680 = vrot.slane %v2551, 1
    %v2681 = vsel %vm2587, %v2680, %v2679
    %v2682 = vsel %vm2590, %v2556, %v2681
    %v2683 = vrot.slane %v2561, 7
    %v2684 = vsel %vm2593, %v2683, %v2682
    %v2685 = vrot.slane %v2566, 6
    %v2686 = vsel %vm2596, %v2685, %v2684
    %2687 = vrot.lane.b32.xlu0 %v2686, 32
    %v2688 = vpop.permute.xlu0 %2687
    %2690 = vst.msk [vmem:[#allocation3 + $0x8] sm:$0xff] %vm2617, %v2688
    %v2691 = vrot.slane %v2531, 6
    %v2692 = vrot.slane %v2536, 5
    %v2693 = vsel %vm2578, %v2692, %v2691
    %v2694 = vrot.slane %v2541, 4
    %v2695 = vsel %vm2581, %v2694, %v2693
    %v2696 = vrot.slane %v2546, 3
    %v2697 = vsel %vm2584, %v2696, %v2695
    %v2698 = vrot.slane %v2551, 2
    %v2699 = vsel %vm2587, %v2698, %v2697
    %v2700 = vrot.slane %v2556, 1
    %v2701 = vsel %vm2590, %v2700, %v2699
    %v2702 = vsel %vm2593, %v2561, %v2701
    %v2703 = vrot.slane %v2566, 7
    %v2704 = vsel %vm2596, %v2703, %v2702
    %2705 = vrot.lane.b32.xlu0 %v2704, 64
    %v2706 = vpop.permute.xlu0 %2705
    %2708 = vst.msk [vmem:[#allocation3 + $0x8] sm:$0xff] %vm2636, %v2706
    %v2709 = vrot.slane %v2531, 7
    %v2710 = vrot.slane %v2536, 6
    %v2711 = vsel %vm2578, %v2710, %v2709
    %v2712 = vrot.slane %v2541, 5
    %v2713 = vsel %vm2581, %v2712, %v2711
    %v2714 = vrot.slane %v2546, 4
    %v2715 = vsel %vm2584, %v2714, %v2713
    %v2716 = vrot.slane %v2551, 3
    %v2717 = vsel %vm2587, %v2716, %v2715
    %v2718 = vrot.slane %v2556, 2
    %v2719 = vsel %vm2590, %v2718, %v2717
    %v2720 = vrot.slane %v2561, 1
    %v2721 = vsel %vm2593, %v2720, %v2719
    %v2722 = vsel %vm2596, %v2566, %v2721
    %2723 = vrot.lane.b32.xlu0 %v2722, 96
    %v2724 = vpop.permute.xlu0 %2723
    %2726 = vst.msk [vmem:[#allocation3 + $0x8] sm:$0xff] %vm2655, %v2724
    %v2727 = vld [vmem:[%s10] sm:$0xff]
    %v2728 = vld [vmem:[%s10 + $0x8] sm:$0xff]
    %v2729 = vld [vmem:[%s10 + $0x10] sm:$0xff]
    %v2730 = vld [vmem:[%s10 + $0x18] sm:$0xff]
    %v2731 = vld [vmem:[%s10 + $0x20] sm:$0xff]
    %v2732 = vld [vmem:[%s10 + $0x28] sm:$0xff]
    %v2733 = vld [vmem:[%s10 + $0x30] sm:$0xff]
    %v2734 = vld [vmem:[%s10 + $0x38] sm:$0xff]
    %2735 = vmatprep.subr.mxu0 0.0
    %2736 = vmatpush1.msra.mxu0 %v2727
    %2737 = vmatprep.subr.mxu0 0.0
    %2738 = vmatpush1.msra.mxu0 %v2728
    %2739 = vmatprep.subr.mxu0 0.0
    %2740 = vmatpush1.msra.mxu0 %v2729
    %2741 = vmatprep.subr.mxu0 0.0
    %2742 = vmatpush1.msra.mxu0 %v2730
    %2743 = vmatprep.subr.mxu0 0.0
    %2744 = vmatpush1.msra.mxu0 %v2731
    %2745 = vmatprep.subr.mxu0 0.0
    %2746 = vmatpush1.msra.mxu0 %v2732
    %2747 = vmatprep.subr.mxu0 0.0
    %2748 = vmatpush1.msra.mxu0 %v2733
    %2749 = vmatprep.subr.mxu0 0.0
    %2750 = vmatpush1.msra.mxu0 %v2734
    %2751 = vmatprep.subr.mxu0 0.0
    %2752 = vmatpush1.msra.mxu0 0.0
    %2753 = vmatprep.subr.mxu0 0.0
    %2754 = vmatpush1.msra.mxu0 0.0
    %2755 = vmatprep.subr.mxu0 0.0
    %2756 = vmatpush1.msra.mxu0 0.0
    %2757 = vmatprep.subr.mxu0 0.0
    %2758 = vmatpush1.msra.mxu0 0.0
    %2759 = vmatprep.subr.mxu0 0.0
    %2760 = vmatpush1.msra.mxu0 0.0
    %2761 = vmatprep.subr.mxu0 0.0
    %2762 = vmatpush1.msra.mxu0 0.0
    %2763 = vmatprep.subr.mxu0 0.0
    %2764 = vmatpush1.msra.mxu0 0.0
    %2765 = vmatprep.subr.mxu0 0.0
    %2766 = vmatpush1.msra.mxu0 0.0
    %2767 = vmatprep.subr.mxu0 0.0
    %2768 = vmatpush1.msra.mxu0 0.0
    %2769 = vmatprep.subr.mxu0 0.0
    %2770 = vmatpush1.msra.mxu0 0.0
    %2771 = vmatprep.subr.mxu0 0.0
    %2772 = vmatpush1.msra.mxu0 0.0
    %2773 = vmatprep.subr.mxu0 0.0
    %2774 = vmatpush1.msra.mxu0 0.0
    %2775 = vmatprep.subr.mxu0 0.0
    %2776 = vmatpush1.msra.mxu0 0.0
    %2777 = vmatprep.subr.mxu0 0.0
    %2778 = vmatpush1.msra.mxu0 0.0
    %2779 = vmatprep.subr.mxu0 0.0
    %2780 = vmatpush1.msra.mxu0 0.0
    %2781 = vmatprep.subr.mxu0 0.0
    %2782 = vmatpush1.msra.mxu0 0.0
    %2783 = vmatprep.subr.mxu0 0.0
    %2784 = vmatpush1.msra.mxu0 0.0
    %2785 = vmatprep.subr.mxu0 0.0
    %2786 = vmatpush1.msra.mxu0 0.0
    %2787 = vmatprep.subr.mxu0 0.0
    %2788 = vmatpush1.msra.mxu0 0.0
    %2789 = vmatprep.subr.mxu0 0.0
    %2790 = vmatpush1.msra.mxu0 0.0
    %2791 = vmatprep.subr.mxu0 0.0
    %2792 = vmatpush1.msra.mxu0 0.0
    %2793 = vmatprep.subr.mxu0 0.0
    %2794 = vmatpush1.msra.mxu0 0.0
    %2795 = vmatprep.subr.mxu0 0.0
    %2796 = vmatpush1.msra.mxu0 0.0
    %2797 = vmatprep.subr.mxu0 0.0
    %2798 = vmatpush1.msra.mxu0 0.0
    %2799 = vmatprep.mubr.f32.mxu0 0.0
    %2800 = vmatmul.mubr.f32.gmra.mrb[0].mxu0 %v1622
    %v2801 = vpop.f32.mrb[0].mxu0
    %v2802 = vadd.f32 0.0, %v2801
    %v2803 = vpop.f32.mrb[0].mxu0
    %2804 = vmatprep.mubr.f32.mxu0 0.0
    %2805 = vmatmul.mubr.f32.gmra.mrb[0].mxu0 %v1727
    %v2806 = vpop.f32.mrb[0].mxu0
    %v2807 = vadd.f32 0.0, %v2806
    %v2808 = vpop.f32.mrb[0].mxu0
    %2809 = vmatprep.mubr.f32.mxu0 0.0
    %2810 = vmatmul.mubr.f32.gmra.mrb[0].mxu0 %v1832
    %v2811 = vpop.f32.mrb[0].mxu0
    %v2812 = vadd.f32 0.0, %v2811
    %v2813 = vpop.f32.mrb[0].mxu0
    %2814 = vmatprep.mubr.f32.mxu0 0.0
    %2815 = vmatmul.mubr.f32.gmra.mrb[0].mxu0 %v1937
    %v2816 = vpop.f32.mrb[0].mxu0
    %v2817 = vadd.f32 0.0, %v2816
    %v2818 = vpop.f32.mrb[0].mxu0
    %2819 = vmatprep.mubr.f32.mxu0 0.0
    %2820 = vmatmul.mubr.f32.gmra.mrb[0].mxu0 %v2042
    %v2821 = vpop.f32.mrb[0].mxu0
    %v2822 = vadd.f32 0.0, %v2821
    %v2823 = vpop.f32.mrb[0].mxu0
    %2824 = vmatprep.mubr.f32.mxu0 0.0
    %2825 = vmatmul.mubr.f32.gmra.mrb[0].mxu0 %v2147
    %v2826 = vpop.f32.mrb[0].mxu0
    %v2827 = vadd.f32 0.0, %v2826
    %v2828 = vpop.f32.mrb[0].mxu0
    %2829 = vmatprep.mubr.f32.mxu0 0.0
    %2830 = vmatmul.mubr.f32.gmra.mrb[0].mxu0 %v2252
    %v2831 = vpop.f32.mrb[0].mxu0
    %v2832 = vadd.f32 0.0, %v2831
    %v2833 = vpop.f32.mrb[0].mxu0
    %2834 = vmatprep.mubr.f32.mxu0 0.0
    %2835 = vmatmul.mubr.f32.gmra.mrb[0].mxu0 %v2357
    %v2836 = vpop.f32.mrb[0].mxu0
    %v2837 = vadd.f32 0.0, %v2836
    %v2838 = vpop.f32.mrb[0].mxu0
    %2839 = vdwg.mxu0
    %vm2840 = vcmask 64512
    %2841 = vst.msk [vmem:[#allocation5] sm:$0xff] %vm2840, %v2802
    %2842 = vst.msk [vmem:[#allocation5 + $0x8] sm:$0xff] %vm2840, %v2807
    %2843 = vst.msk [vmem:[#allocation5 + $0x10] sm:$0xff] %vm2840, %v2812
    %2844 = vst.msk [vmem:[#allocation5 + $0x18] sm:$0xff] %vm2840, %v2817
    %2845 = vst.msk [vmem:[#allocation5 + $0x20] sm:$0xff] %vm2840, %v2822
    %2846 = vst.msk [vmem:[#allocation5 + $0x28] sm:$0xff] %vm2840, %v2827
    %2847 = vst.msk [vmem:[#allocation5 + $0x30] sm:$0xff] %vm2840, %v2832
    %2848 = vst.msk [vmem:[#allocation5 + $0x38] sm:$0xff] %vm2840, %v2837
    // Predicated region
    $region46: #{tpu_custom_call.1} parent=1 // pred_check
      _
    $region47: #{tpu_custom_call.1} parent=1 // pred_check_branch
      %2850 = sbr.rel (0) target = $region49
    $region48: #{tpu_custom_call.1} parent=1 // pred_region
      %s2852 = ssub.s32 256, 256
      %2853 = vsyncadd [#allocation4], %s2852
      %s2855 = sshll.u32 [#allocation3], 4
      %s2856 = int_to_ptr.vmem [resolvable:$true] %s2855
      %2858 = dma.vmem_to_hbm [thread:$0]  %s2856, 256, %s11, [#allocation4]
    $region49: #{tpu_custom_call.1} parent=1 // pred_fallthru
      _
    // Predicated region
    $region50: #{tpu_custom_call.1} parent=1 // pred_check
      _
    $region51: #{tpu_custom_call.1} parent=1 // pred_check_branch
      %2860 = sbr.rel (0) target = $region53
    $region52: #{tpu_custom_call.1} parent=1 // pred_region
      %s2862 = ssub.s32 1024, 1024
      %2863 = vsyncadd [#allocation6], %s2862
      %s2864 = sshll.u32 [#allocation5], 4
      %s2865 = int_to_ptr.vmem [resolvable:$true] %s2864
      %2870 = dma.vmem_to_hbm [thread:$0]  %s2865, 1024, %s12, [#allocation6], 128, 128, 8
    $region53: #{tpu_custom_call.1} parent=1 // pred_fallthru
      _
    // Predicated region
    $region54: #{tpu_custom_call.1} parent=1 // pred_check
      _
    $region55: #{tpu_custom_call.1} parent=1 // pred_check_branch
      %2872 = sbr.rel (0) target = $region57
    $region56: #{tpu_custom_call.1} parent=1 // pred_region
      %2873 = dma.done [#allocation4], 256
    $region57: #{tpu_custom_call.1} parent=1 // pred_fallthru
      _
    // Predicated region
    $region58: #{tpu_custom_call.1} parent=1 // pred_check
      _
    $region59: #{tpu_custom_call.1} parent=1 // pred_check_branch
      %2875 = sbr.rel (0) target = $region61
    $region60: #{tpu_custom_call.1} parent=1 // pred_region
      %2876 = dma.done [#allocation6], 1024
    $region61: #{tpu_custom_call.1} parent=1 // pred_fallthru
      _
    %2877 = vsyncpa [#allocation4], 1
    %2878 = vsyncpa [#allocation6], 1

</llo_original>
